<compile_context>
chip_gen: v6e
topology: v6e:2x2x1
jax: 0.10.0
libtpu: 0.0.40
codegen_flags: <defaults>
</compile_context>

<pallas_src>
import itertools

import jax
import jax.numpy as jnp
from jax.experimental import pallas as pl
from jax.experimental.pallas import tpu as pltpu


# ----------------------------------------------------------------------------- #
# Host-side packing helpers (fewer, larger kernel operands).
# ----------------------------------------------------------------------------- #
def pack_rows(named_mats, dtype, row_align=8):
    """Stack 2-D arrays along rows.  Each piece is zero-padded to the common max
    lane width and to a multiple of `row_align` rows so every in-kernel static
    slice starts sublane-aligned.  Returns (packed, {name: row_offset})."""
    width = max(m.shape[1] for _, m in named_mats)
    pieces, offs, row = [], {}, 0
    for name, m in named_mats:
        r, c = m.shape
        rp = r + (-r) % row_align
        blk = jnp.zeros((rp, width), dtype).at[:r, :c].set(m.astype(dtype))
        pieces.append(blk)
        offs[name] = row
        row += rp
    return jnp.concatenate(pieces, axis=0), offs


def pack_cols(named_mats, dtype, col_align=128):
    """Stack 2-D arrays (same row count) along lanes, each zero-padded to a multiple
    of `col_align` lanes so every in-kernel static slice starts lane-aligned."""
    pieces, offs, col = [], {}, 0
    for name, m in named_mats:
        r, c = m.shape
        cp = c + (-c) % col_align
        blk = jnp.zeros((r, cp), dtype).at[:, :c].set(m.astype(dtype))
        pieces.append(blk)
        offs[name] = col
        col += cp
    return jnp.concatenate(pieces, axis=1), offs


def block_diag_tile(m, k):
    """k copies of m on the block diagonal."""
    if k == 1:
        return m
    r, c = m.shape
    out = jnp.zeros((k * r, k * c), m.dtype)
    for i in range(k):
        out = out.at[i * r:(i + 1) * r, i * c:(i + 1) * c].set(m)
    return out


# ----------------------------------------------------------------------------- #
# Fused GraphNetAdv kernel (one batch tile per grid step).
# ----------------------------------------------------------------------------- #
def build_graphnet_kernel(N, Nv, P, S, H, De, Do, T, Bt,
                          g_offs, s_offs, w_offs, b_offs):
    BtN, BtNv = Bt * N, Bt * Nv
    BtNr, BtNt = Bt * N * (N - 1), Bt * N * Nv
    f32, bf16 = jnp.float32, jnp.bfloat16

    def kernel(x_ref, y_ref, g_ref, s_ref, w_ref, b_ref, out_ref):
        def mm(a, b):
            return jnp.dot(a, b, preferred_element_type=f32)

        def wmat(name, rows, cols):
            off = w_offs[name]
            return w_ref[off:off + rows, 0:cols]

        def bias(name, cols):
            off = b_offs[name]
            return b_ref[off:off + 1, 0:cols]

        relu = lambda v: jnp.maximum(v, 0.0)

        x = x_ref[...]                                    # (Bt*N,  P)  bf16
        y = y_ref[...]                                    # (Bt*Nv, S)  bf16

        # ---- particle-particle edges: gather + fr1/fr2/fr3, all batches stacked --
        rrT = g_ref[g_offs["rrT"]:g_offs["rrT"] + BtNr, :]     # (Bt*Nr, Bt*N)
        rsT = g_ref[g_offs["rsT"]:g_offs["rsT"] + BtNr, :]
        orr = mm(rrT, x)                                       # (Bt*Nr, P)
        ors = mm(rsT, x)
        eb = jnp.concatenate([orr, ors], axis=-1).astype(bf16)  # (Bt*Nr, 2P)
        eb = relu(mm(eb, wmat("w1", 2 * P, H)) + bias("b1", H))
        eb = relu(mm(eb.astype(bf16), wmat("w2", H, H)) + bias("b2", H))
        e_pp = relu(mm(eb.astype(bf16), wmat("w3", H, De)) + bias("b3", De))
        rr = s_ref[:, s_offs["rr"]:s_offs["rr"] + BtNr]        # (Bt*N, Bt*Nr)
        ebar_pp = mm(rr, e_pp.astype(bf16))                    # (Bt*N, De)

        # ---- particle-vertex edges: gather + fr1_pv/fr2_pv/fr3_pv ---------------
        rkT = g_ref[g_offs["rkT"]:g_offs["rkT"] + BtNt, :]       # (Bt*Nt, Bt*N)
        rvT = g_ref[g_offs["rvT"]:g_offs["rvT"] + BtNt, 0:BtNv]  # (Bt*Nt, Bt*Nv)
        ork = mm(rkT, x)                                         # (Bt*Nt, P)
        orv = mm(rvT, y)                                         # (Bt*Nt, S)
        eb = jnp.concatenate([ork, orv], axis=-1).astype(bf16)   # (Bt*Nt, P+S)
        eb = relu(mm(eb, wmat("w1pv", P + S, H)) + bias("b1pv", H))
        eb = relu(mm(eb.astype(bf16), wmat("w2pv", H, H)) + bias("b2pv", H))
        e_pv = relu(mm(eb.astype(bf16), wmat("w3pv", H, De)) + bias("b3pv", De))
        rk = s_ref[:, s_offs["rk"]:s_offs["rk"] + BtNt]          # (Bt*N, Bt*Nt)
        ebar_pv = mm(rk, e_pv.astype(bf16))                      # (Bt*N, De)
        # NOTE: Ebar_vp is computed by the torch code but unused when vv_branch=False.

        # ---- node MLP fo1/fo2/fo3 ------------------------------------------------
        cn = jnp.concatenate(
            [x, ebar_pp.astype(bf16), ebar_pv.astype(bf16)], axis=-1)  # (Bt*N, P+2De)
        cn = relu(mm(cn, wmat("wo1", P + 2 * De, H)) + bias("bo1", H))
        cn = relu(mm(cn.astype(bf16), wmat("wo2", H, H)) + bias("bo2", H))
        o = relu(mm(cn.astype(bf16), wmat("wo3", H, Do)) + bias("bo3", Do))  # (Bt*N, Do)

        # ---- per-batch node sum as one MXU pass (iota-built segment matrix) ------
        bids = jax.lax.broadcasted_iota(jnp.int32, (Bt, BtN), 0)
        nids = jax.lax.broadcasted_iota(jnp.int32, (Bt, BtN), 1)
        lo = bids * N
        seg = jnp.where((nids >= lo) & (nids < lo + N), 1.0, 0.0).astype(bf16)
        nsum = mm(seg, o.astype(bf16))                           # (Bt, Do)

        # ---- fc_fixed; single lane-contiguous store of [F | N] -------------------
        F = mm(nsum.astype(bf16), wmat("wc", Do, T)) + bias("bc", T)   # (Bt, T)
        out_ref[...] = jnp.concatenate([F, nsum], axis=-1)

    return kernel


# ----------------------------------------------------------------------------- #
# Relation matrices / parameters (host side).
# ----------------------------------------------------------------------------- #
def make_rr_rs(N):
    Nr = N * (N - 1)
    pairs = [p for p in itertools.product(range(N), range(N)) if p[0] != p[1]]
    r_rows = jnp.array([r for r, s in pairs], jnp.int32)
    s_rows = jnp.array([s for r, s in pairs], jnp.int32)
    cols = jnp.arange(Nr)
    Rr = jnp.zeros((N, Nr), jnp.float32).at[r_rows, cols].set(1.0)
    Rs = jnp.zeros((N, Nr), jnp.float32).at[s_rows, cols].set(1.0)
    return Rr, Rs


def make_rk_rv(N, Nv):
    Nt = N * Nv
    pairs = list(itertools.product(range(N), range(Nv)))
    k_rows = jnp.array([k for k, v in pairs], jnp.int32)
    v_rows = jnp.array([v for k, v in pairs], jnp.int32)
    cols = jnp.arange(Nt)
    Rk = jnp.zeros((N, Nt), jnp.float32).at[k_rows, cols].set(1.0)
    Rv = jnp.zeros((Nv, Nt), jnp.float32).at[v_rows, cols].set(1.0)
    return Rk, Rv


def init_params(key, P, S, hidden, De, Do, n_targets):
    """Synthetic weights.  nn.Linear(in, out) stored pre-transposed as (in, out) /
    (1, out) so the kernel does x @ W + b.  fr2/fo2 map hidden -> hidden (as in the
    module)."""
    H = hidden
    shapes = {
        "w1":   (2 * P, H),       "b1":   (1, H),
        "w2":   (H, H),           "b2":   (1, H),
        "w3":   (H, De),          "b3":   (1, De),
        "w1pv": (P + S, H),       "b1pv": (1, H),
        "w2pv": (H, H),           "b2pv": (1, H),
        "w3pv": (H, De),          "b3pv": (1, De),
        "wo1":  (P + 2 * De, H),  "bo1":  (1, H),
        "wo2":  (H, H),           "bo2":  (1, H),
        "wo3":  (H, Do),          "bo3":  (1, Do),
        "wc":   (Do, n_targets),  "bc":   (1, n_targets),
    }
    params = {}
    keys = jax.random.split(key, len(shapes))
    for k, (name, shp) in zip(keys, sorted(shapes.items())):
        params[name] = 0.1 * jax.random.normal(k, shp, jnp.float32)
    return params


# ----------------------------------------------------------------------------- #
# Wrapper: layout transforms, constant packing, pallas_call.
# ----------------------------------------------------------------------------- #
def graphnet_forward(x_pn, y_pn, params, Rr, Rs, Rk, Rv, *, num_tiles=1):
    """x_pn: (B, P, N), y_pn: (B, S, Nv) float32 (PyTorch channels-first layout).
    Returns (F, N_sum) like GraphNetAdv.forward.
    num_tiles > 1 splits the batch across a 'parallel' grid axis (useful on v7x's
    two TensorCores at production batch sizes); at toy shapes use 1."""
    B, P, N = x_pn.shape
    _, S, Nv = y_pn.shape
    H = params["w2"].shape[0]
    De = params["w3"].shape[1]
    Do = params["wo3"].shape[1]
    T = params["wc"].shape[1]

    assert B % num_tiles == 0
    Bt = B // num_tiles
    if num_tiles > 1:
        # (8,128) block rules for the tiled row/output blocks.
        assert (Bt * N) % 8 == 0 and (Bt * Nv) % 8 == 0 and Bt % 8 == 0

    bf16, f32 = jnp.bfloat16, jnp.float32

    # Node-major, batch-flattened inputs: rows = batch*node, lanes = features.
    x_flat = jnp.transpose(x_pn, (0, 2, 1)).reshape(B * N, P).astype(bf16)
    y_flat = jnp.transpose(y_pn, (0, 2, 1)).reshape(B * Nv, S).astype(bf16)

    # Block-diagonal relation matrices for one batch tile (shared across tiles).
    rrT_b = block_diag_tile(Rr.T, Bt)          # (Bt*Nr, Bt*N)
    rsT_b = block_diag_tile(Rs.T, Bt)
    rkT_b = block_diag_tile(Rk.T, Bt)          # (Bt*Nt, Bt*N)
    rvT_b = block_diag_tile(Rv.T, Bt)          # (Bt*Nt, Bt*Nv)
    rr_b = block_diag_tile(Rr, Bt)             # (Bt*N, Bt*Nr)
    rk_b = block_diag_tile(Rk, Bt)             # (Bt*N, Bt*Nt)

    # Pack 6 operands total: x, y, gather-pack, scatter-pack, weight-pack, bias-pack.
    g_pack, g_offs = pack_rows(
        [("rrT", rrT_b), ("rsT", rsT_b), ("rkT", rkT_b), ("rvT", rvT_b)],
        dtype=bf16, row_align=16)
    s_pack, s_offs = pack_cols([("rr", rr_b), ("rk", rk_b)], dtype=bf16)
    w_pack, w_offs = pack_rows(
        [("w1", params["w1"]), ("w2", params["w2"]), ("w3", params["w3"]),
         ("w1pv", params["w1pv"]), ("w2pv", params["w2pv"]), ("w3pv", params["w3pv"]),
         ("wo1", params["wo1"]), ("wo2", params["wo2"]), ("wo3", params["wo3"]),
         ("wc", params["wc"])],
        dtype=bf16, row_align=16)
    b_pack, b_offs = pack_rows(
        [("b1", params["b1"]), ("b2", params["b2"]), ("b3", params["b3"]),
         ("b1pv", params["b1pv"]), ("b2pv", params["b2pv"]), ("b3pv", params["b3pv"]),
         ("bo1", params["bo1"]), ("bo2", params["bo2"]), ("bo3", params["bo3"]),
         ("bc", params["bc"])],
        dtype=f32, row_align=8)

    kernel = build_graphnet_kernel(N, Nv, P, S, H, De, Do, T, Bt,
                                   g_offs, s_offs, w_offs, b_offs)

    def const_spec(a):
        return pl.BlockSpec(a.shape, lambda g: (0, 0))

    out = pl.pallas_call(
        kernel,
        out_shape=jax.ShapeDtypeStruct((B, T + Do), f32),
        grid=(num_tiles,),
        in_specs=[
            pl.BlockSpec((Bt * N, P), lambda g: (g, 0)),
            pl.BlockSpec((Bt * Nv, S), lambda g: (g, 0)),
            const_spec(g_pack), const_spec(s_pack),
            const_spec(w_pack), const_spec(b_pack),
        ],
        out_specs=pl.BlockSpec((Bt, T + Do), lambda g: (g, 0)),
        compiler_params=pltpu.CompilerParams(
            dimension_semantics=("parallel",)),
    )(x_flat, y_flat, g_pack, s_pack, w_pack, b_pack)

    return out[:, :T], out[:, T:]


# ----------------------------------------------------------------------------- #
# Pure-JAX f32 reference mirroring GraphNetAdv.forward (vv_branch=False).
# ----------------------------------------------------------------------------- #
def reference_forward(x_pn, y_pn, params, Rr, Rs, Rk, Rv):
    relu = jax.nn.relu
    x = jnp.transpose(x_pn, (0, 2, 1))                      # (B, N, P)
    y = jnp.transpose(y_pn, (0, 2, 1))                      # (B, Nv, S)

    orr = jnp.einsum("rn,bnp->brp", Rr.T, x)
    ors = jnp.einsum("rn,bnp->brp", Rs.T, x)
    b = jnp.concatenate([orr, ors], axis=-1)
    b = relu(b @ params["w1"] + params["b1"])
    b = relu(b @ params["w2"] + params["b2"])
    e = relu(b @ params["w3"] + params["b3"])
    ebar_pp = jnp.einsum("nr,brd->bnd", Rr, e)

    ork = jnp.einsum("tn,bnp->btp", Rk.T, x)
    orv = jnp.einsum("tv,bvs->bts", Rv.T, y)
    b = jnp.concatenate([ork, orv], axis=-1)
    b = relu(b @ params["w1pv"] + params["b1pv"])
    b = relu(b @ params["w2pv"] + params["b2pv"])
    e = relu(b @ params["w3pv"] + params["b3pv"])
    ebar_pv = jnp.einsum("nt,btd->bnd", Rk, e)

    c = jnp.concatenate([x, ebar_pp, ebar_pv], axis=-1)
    c = relu(c @ params["wo1"] + params["bo1"])
    c = relu(c @ params["wo2"] + params["bo2"])
    o = relu(c @ params["wo3"] + params["bo3"])

    nsum = jnp.sum(o, axis=1)
    F = nsum @ params["wc"] + params["bc"]
    return F, nsum


if __name__ == "__main__":
    # Small shapes consistent with the module:
    #   n_constituents N=8, params P=4, n_vertices Nv=3, params_v S=3,
    #   hidden=32, De=5, Do=6, n_targets=2, batch=2
    B, P, N = 2, 4, 8
    S, Nv = 3, 3
    hidden, De, Do, n_targets = 32, 5, 6, 2

    key = jax.random.PRNGKey(0)
    kx, ky, kp = jax.random.split(key, 3)
    x = jax.random.normal(kx, (B, P, N), jnp.float32)       # torch layout (B, P, N)
    y = jax.random.normal(ky, (B, S, Nv), jnp.float32)      # torch layout (B, S, Nv)

    params = init_params(kp, P, S, hidden, De, Do, n_targets)
    Rr, Rs = make_rr_rs(N)
    Rk, Rv = make_rk_rv(N, Nv)

    F, Nsum = graphnet_forward(x, y, params, Rr, Rs, Rk, Rv, num_tiles=1)
    F = jax.block_until_ready(F)
    Nsum = jax.block_until_ready(Nsum)

    F_ref, N_ref = reference_forward(x, y, params, Rr, Rs, Rk, Rv)
    assert F.shape == (B, n_targets) and Nsum.shape == (B, Do)
    # Kernel runs the MXU in bf16 (f32 accumulation); compare against the f32
    # reference with a correspondingly loose tolerance.
    assert jnp.allclose(F, F_ref, atol=5e-2, rtol=5e-2)
    assert jnp.allclose(Nsum, N_ref, atol=5e-2, rtol=5e-2)

    print("KERNEL_OK")
</pallas_src>

<mosaic_0001>
module attributes {stable_mosaic.version = 11 : i64} {
  func.func @kernel(%arg0: i32, %arg1: memref<16x4xbf16, #tpu.memory_space<vmem>>, %arg2: memref<6x3xbf16, #tpu.memory_space<vmem>>, %arg3: memref<320x16xbf16, #tpu.memory_space<vmem>>, %arg4: memref<16x256xbf16, #tpu.memory_space<vmem>>, %arg5: memref<256x32xbf16, #tpu.memory_space<vmem>>, %arg6: memref<80x32xf32, #tpu.memory_space<vmem>>, %arg7: memref<2x8xf32, #tpu.memory_space<vmem>>) attributes {dimension_semantics = [#tpu.dimension_semantics<parallel>], iteration_bounds = array<i64: 1>, scalar_prefetch = 0 : i64, scratch_operands = 0 : i64, tpu.core_type = #tpu.core_type<tc>, window_params = [{transform_indices = @transform_0, window_bounds = array<i64: 16, 4>}, {transform_indices = @transform_1, window_bounds = array<i64: 6, 3>}, {pipeline_mode = #tpu.pipeline_mode<synchronous>, transform_indices = @transform_2, window_bounds = array<i64: 320, 16>}, {pipeline_mode = #tpu.pipeline_mode<synchronous>, transform_indices = @transform_3, window_bounds = array<i64: 16, 256>}, {pipeline_mode = #tpu.pipeline_mode<synchronous>, transform_indices = @transform_4, window_bounds = array<i64: 256, 32>}, {pipeline_mode = #tpu.pipeline_mode<synchronous>, transform_indices = @transform_5, window_bounds = array<i64: 80, 32>}, {transform_indices = @transform_6, window_bounds = array<i64: 2, 8>}]} {
    %c0 = arith.constant 0 : index
    %c0_0 = arith.constant 0 : index
    %0 = vector.load %arg1[%c0, %c0_0] : memref<16x4xbf16, #tpu.memory_space<vmem>>, vector<16x4xbf16>
    %c0_1 = arith.constant 0 : index
    %c0_2 = arith.constant 0 : index
    %1 = vector.load %arg2[%c0_1, %c0_2] : memref<6x3xbf16, #tpu.memory_space<vmem>>, vector<6x3xbf16>
    %c0_3 = arith.constant 0 : index
    %c0_4 = arith.constant 0 : index
    %2 = vector.load %arg3[%c0_3, %c0_4] : memref<320x16xbf16, #tpu.memory_space<vmem>>, vector<112x16xbf16>
    %c112 = arith.constant 112 : index
    %c0_5 = arith.constant 0 : index
    %3 = vector.load %arg3[%c112, %c0_5] : memref<320x16xbf16, #tpu.memory_space<vmem>>, vector<112x16xbf16>
    %cst = arith.constant dense<0.000000e+00> : vector<112x4xf32>
    %4 = tpu.matmul %2, %0, %cst {dimension_numbers = #tpu.dot_dimension_numbers<[1], [0], [0], [1], [0, 0, 1, 1], [], []>} : vector<112x16xbf16>, vector<16x4xbf16>, vector<112x4xf32> -> vector<112x4xf32>
    %cst_6 = arith.constant dense<0.000000e+00> : vector<112x4xf32>
    %5 = tpu.matmul %3, %0, %cst_6 {dimension_numbers = #tpu.dot_dimension_numbers<[1], [0], [0], [1], [0, 0, 1, 1], [], []>} : vector<112x16xbf16>, vector<16x4xbf16>, vector<112x4xf32> -> vector<112x4xf32>
    %6 = tpu.concatenate %4, %5 in 1 : vector<112x4xf32>, vector<112x4xf32> -> vector<112x8xf32>
    %7 = arith.truncf %6 : vector<112x8xf32> to vector<112x8xbf16>
    %c0_7 = arith.constant 0 : index
    %c0_8 = arith.constant 0 : index
    %8 = vector.load %arg5[%c0_7, %c0_8] : memref<256x32xbf16, #tpu.memory_space<vmem>>, vector<8x32xbf16>
    %cst_9 = arith.constant dense<0.000000e+00> : vector<112x32xf32>
    %9 = tpu.matmul %7, %8, %cst_9 {dimension_numbers = #tpu.dot_dimension_numbers<[1], [0], [0], [1], [0, 0, 1, 1], [], []>} : vector<112x8xbf16>, vector<8x32xbf16>, vector<112x32xf32> -> vector<112x32xf32>
    %c0_10 = arith.constant 0 : index
    %c0_11 = arith.constant 0 : index
    %10 = vector.load %arg6[%c0_10, %c0_11] : memref<80x32xf32, #tpu.memory_space<vmem>>, vector<1x32xf32>
    %11 = vector.broadcast %10 : vector<1x32xf32> to vector<112x32xf32>
    %12 = arith.addf %9, %11 : vector<112x32xf32>
    %cst_12 = arith.constant 0.000000e+00 : f32
    %13 = vector.broadcast %cst_12 : f32 to vector<112x32xf32>
    %14 = arith.maximumf %12, %13 : vector<112x32xf32>
    %15 = arith.truncf %14 : vector<112x32xf32> to vector<112x32xbf16>
    %c16 = arith.constant 16 : index
    %c0_13 = arith.constant 0 : index
    %16 = vector.load %arg5[%c16, %c0_13] : memref<256x32xbf16, #tpu.memory_space<vmem>>, vector<32x32xbf16>
    %cst_14 = arith.constant dense<0.000000e+00> : vector<112x32xf32>
    %17 = tpu.matmul %15, %16, %cst_14 {dimension_numbers = #tpu.dot_dimension_numbers<[1], [0], [0], [1], [0, 0, 1, 1], [], []>} : vector<112x32xbf16>, vector<32x32xbf16>, vector<112x32xf32> -> vector<112x32xf32>
    %c8 = arith.constant 8 : index
    %c0_15 = arith.constant 0 : index
    %18 = vector.load %arg6[%c8, %c0_15] : memref<80x32xf32, #tpu.memory_space<vmem>>, vector<1x32xf32>
    %19 = vector.broadcast %18 : vector<1x32xf32> to vector<112x32xf32>
    %20 = arith.addf %17, %19 : vector<112x32xf32>
    %cst_16 = arith.constant 0.000000e+00 : f32
    %21 = vector.broadcast %cst_16 : f32 to vector<112x32xf32>
    %22 = arith.maximumf %20, %21 : vector<112x32xf32>
    %23 = arith.truncf %22 : vector<112x32xf32> to vector<112x32xbf16>
    %c48 = arith.constant 48 : index
    %c0_17 = arith.constant 0 : index
    %24 = vector.load %arg5[%c48, %c0_17] : memref<256x32xbf16, #tpu.memory_space<vmem>>, vector<32x5xbf16>
    %cst_18 = arith.constant dense<0.000000e+00> : vector<112x5xf32>
    %25 = tpu.matmul %23, %24, %cst_18 {dimension_numbers = #tpu.dot_dimension_numbers<[1], [0], [0], [1], [0, 0, 1, 1], [], []>} : vector<112x32xbf16>, vector<32x5xbf16>, vector<112x5xf32> -> vector<112x5xf32>
    %c16_19 = arith.constant 16 : index
    %c0_20 = arith.constant 0 : index
    %26 = vector.load %arg6[%c16_19, %c0_20] : memref<80x32xf32, #tpu.memory_space<vmem>>, vector<1x5xf32>
    %27 = vector.broadcast %26 : vector<1x5xf32> to vector<112x5xf32>
    %28 = arith.addf %25, %27 : vector<112x5xf32>
    %cst_21 = arith.constant 0.000000e+00 : f32
    %29 = vector.broadcast %cst_21 : f32 to vector<112x5xf32>
    %30 = arith.maximumf %28, %29 : vector<112x5xf32>
    %c0_22 = arith.constant 0 : index
    %c0_23 = arith.constant 0 : index
    %31 = vector.load %arg4[%c0_22, %c0_23] : memref<16x256xbf16, #tpu.memory_space<vmem>>, vector<16x112xbf16>
    %32 = arith.truncf %30 : vector<112x5xf32> to vector<112x5xbf16>
    %cst_24 = arith.constant dense<0.000000e+00> : vector<16x5xf32>
    %33 = tpu.matmul %31, %32, %cst_24 {dimension_numbers = #tpu.dot_dimension_numbers<[1], [0], [0], [1], [0, 0, 1, 1], [], []>} : vector<16x112xbf16>, vector<112x5xbf16>, vector<16x5xf32> -> vector<16x5xf32>
    %c224 = arith.constant 224 : index
    %c0_25 = arith.constant 0 : index
    %34 = vector.load %arg3[%c224, %c0_25] : memref<320x16xbf16, #tpu.memory_space<vmem>>, vector<48x16xbf16>
    %c272 = arith.constant 272 : index
    %c0_26 = arith.constant 0 : index
    %35 = vector.load %arg3[%c272, %c0_26] : memref<320x16xbf16, #tpu.memory_space<vmem>>, vector<48x6xbf16>
    %cst_27 = arith.constant dense<0.000000e+00> : vector<48x4xf32>
    %36 = tpu.matmul %34, %0, %cst_27 {dimension_numbers = #tpu.dot_dimension_numbers<[1], [0], [0], [1], [0, 0, 1, 1], [], []>} : vector<48x16xbf16>, vector<16x4xbf16>, vector<48x4xf32> -> vector<48x4xf32>
    %cst_28 = arith.constant dense<0.000000e+00> : vector<48x3xf32>
    %37 = tpu.matmul %35, %1, %cst_28 {dimension_numbers = #tpu.dot_dimension_numbers<[1], [0], [0], [1], [0, 0, 1, 1], [], []>} : vector<48x6xbf16>, vector<6x3xbf16>, vector<48x3xf32> -> vector<48x3xf32>
    %38 = tpu.concatenate %36, %37 in 1 : vector<48x4xf32>, vector<48x3xf32> -> vector<48x7xf32>
    %39 = arith.truncf %38 : vector<48x7xf32> to vector<48x7xbf16>
    %c80 = arith.constant 80 : index
    %c0_29 = arith.constant 0 : index
    %40 = vector.load %arg5[%c80, %c0_29] : memref<256x32xbf16, #tpu.memory_space<vmem>>, vector<7x32xbf16>
    %cst_30 = arith.constant dense<0.000000e+00> : vector<48x32xf32>
    %41 = tpu.matmul %39, %40, %cst_30 {dimension_numbers = #tpu.dot_dimension_numbers<[1], [0], [0], [1], [0, 0, 1, 1], [], []>} : vector<48x7xbf16>, vector<7x32xbf16>, vector<48x32xf32> -> vector<48x32xf32>
    %c24 = arith.constant 24 : index
    %c0_31 = arith.constant 0 : index
    %42 = vector.load %arg6[%c24, %c0_31] : memref<80x32xf32, #tpu.memory_space<vmem>>, vector<1x32xf32>
    %43 = vector.broadcast %42 : vector<1x32xf32> to vector<48x32xf32>
    %44 = arith.addf %41, %43 : vector<48x32xf32>
    %cst_32 = arith.constant 0.000000e+00 : f32
    %45 = vector.broadcast %cst_32 : f32 to vector<48x32xf32>
    %46 = arith.maximumf %44, %45 : vector<48x32xf32>
    %47 = arith.truncf %46 : vector<48x32xf32> to vector<48x32xbf16>
    %c96 = arith.constant 96 : index
    %c0_33 = arith.constant 0 : index
    %48 = vector.load %arg5[%c96, %c0_33] : memref<256x32xbf16, #tpu.memory_space<vmem>>, vector<32x32xbf16>
    %cst_34 = arith.constant dense<0.000000e+00> : vector<48x32xf32>
    %49 = tpu.matmul %47, %48, %cst_34 {dimension_numbers = #tpu.dot_dimension_numbers<[1], [0], [0], [1], [0, 0, 1, 1], [], []>} : vector<48x32xbf16>, vector<32x32xbf16>, vector<48x32xf32> -> vector<48x32xf32>
    %c32 = arith.constant 32 : index
    %c0_35 = arith.constant 0 : index
    %50 = vector.load %arg6[%c32, %c0_35] : memref<80x32xf32, #tpu.memory_space<vmem>>, vector<1x32xf32>
    %51 = vector.broadcast %50 : vector<1x32xf32> to vector<48x32xf32>
    %52 = arith.addf %49, %51 : vector<48x32xf32>
    %cst_36 = arith.constant 0.000000e+00 : f32
    %53 = vector.broadcast %cst_36 : f32 to vector<48x32xf32>
    %54 = arith.maximumf %52, %53 : vector<48x32xf32>
    %55 = arith.truncf %54 : vector<48x32xf32> to vector<48x32xbf16>
    %c128 = arith.constant 128 : index
    %c0_37 = arith.constant 0 : index
    %56 = vector.load %arg5[%c128, %c0_37] : memref<256x32xbf16, #tpu.memory_space<vmem>>, vector<32x5xbf16>
    %cst_38 = arith.constant dense<0.000000e+00> : vector<48x5xf32>
    %57 = tpu.matmul %55, %56, %cst_38 {dimension_numbers = #tpu.dot_dimension_numbers<[1], [0], [0], [1], [0, 0, 1, 1], [], []>} : vector<48x32xbf16>, vector<32x5xbf16>, vector<48x5xf32> -> vector<48x5xf32>
    %c40 = arith.constant 40 : index
    %c0_39 = arith.constant 0 : index
    %58 = vector.load %arg6[%c40, %c0_39] : memref<80x32xf32, #tpu.memory_space<vmem>>, vector<1x5xf32>
    %59 = vector.broadcast %58 : vector<1x5xf32> to vector<48x5xf32>
    %60 = arith.addf %57, %59 : vector<48x5xf32>
    %cst_40 = arith.constant 0.000000e+00 : f32
    %61 = vector.broadcast %cst_40 : f32 to vector<48x5xf32>
    %62 = arith.maximumf %60, %61 : vector<48x5xf32>
    %c0_41 = arith.constant 0 : index
    %c128_42 = arith.constant 128 : index
    %63 = vector.load %arg4[%c0_41, %c128_42] : memref<16x256xbf16, #tpu.memory_space<vmem>>, vector<16x48xbf16>
    %64 = arith.truncf %62 : vector<48x5xf32> to vector<48x5xbf16>
    %cst_43 = arith.constant dense<0.000000e+00> : vector<16x5xf32>
    %65 = tpu.matmul %63, %64, %cst_43 {dimension_numbers = #tpu.dot_dimension_numbers<[1], [0], [0], [1], [0, 0, 1, 1], [], []>} : vector<16x48xbf16>, vector<48x5xbf16>, vector<16x5xf32> -> vector<16x5xf32>
    %66 = arith.truncf %33 : vector<16x5xf32> to vector<16x5xbf16>
    %67 = arith.truncf %65 : vector<16x5xf32> to vector<16x5xbf16>
    %68 = tpu.concatenate %0, %66, %67 in 1 : vector<16x4xbf16>, vector<16x5xbf16>, vector<16x5xbf16> -> vector<16x14xbf16>
    %c160 = arith.constant 160 : index
    %c0_44 = arith.constant 0 : index
    %69 = vector.load %arg5[%c160, %c0_44] : memref<256x32xbf16, #tpu.memory_space<vmem>>, vector<14x32xbf16>
    %cst_45 = arith.constant dense<0.000000e+00> : vector<16x32xf32>
    %70 = tpu.matmul %68, %69, %cst_45 {dimension_numbers = #tpu.dot_dimension_numbers<[1], [0], [0], [1], [0, 0, 1, 1], [], []>} : vector<16x14xbf16>, vector<14x32xbf16>, vector<16x32xf32> -> vector<16x32xf32>
    %c48_46 = arith.constant 48 : index
    %c0_47 = arith.constant 0 : index
    %71 = vector.load %arg6[%c48_46, %c0_47] : memref<80x32xf32, #tpu.memory_space<vmem>>, vector<1x32xf32>
    %72 = vector.broadcast %71 : vector<1x32xf32> to vector<16x32xf32>
    %73 = arith.addf %70, %72 : vector<16x32xf32>
    %cst_48 = arith.constant 0.000000e+00 : f32
    %74 = vector.broadcast %cst_48 : f32 to vector<16x32xf32>
    %75 = arith.maximumf %73, %74 : vector<16x32xf32>
    %76 = arith.truncf %75 : vector<16x32xf32> to vector<16x32xbf16>
    %c176 = arith.constant 176 : index
    %c0_49 = arith.constant 0 : index
    %77 = vector.load %arg5[%c176, %c0_49] : memref<256x32xbf16, #tpu.memory_space<vmem>>, vector<32x32xbf16>
    %cst_50 = arith.constant dense<0.000000e+00> : vector<16x32xf32>
    %78 = tpu.matmul %76, %77, %cst_50 {dimension_numbers = #tpu.dot_dimension_numbers<[1], [0], [0], [1], [0, 0, 1, 1], [], []>} : vector<16x32xbf16>, vector<32x32xbf16>, vector<16x32xf32> -> vector<16x32xf32>
    %c56 = arith.constant 56 : index
    %c0_51 = arith.constant 0 : index
    %79 = vector.load %arg6[%c56, %c0_51] : memref<80x32xf32, #tpu.memory_space<vmem>>, vector<1x32xf32>
    %80 = vector.broadcast %79 : vector<1x32xf32> to vector<16x32xf32>
    %81 = arith.addf %78, %80 : vector<16x32xf32>
    %cst_52 = arith.constant 0.000000e+00 : f32
    %82 = vector.broadcast %cst_52 : f32 to vector<16x32xf32>
    %83 = arith.maximumf %81, %82 : vector<16x32xf32>
    %84 = arith.truncf %83 : vector<16x32xf32> to vector<16x32xbf16>
    %c208 = arith.constant 208 : index
    %c0_53 = arith.constant 0 : index
    %85 = vector.load %arg5[%c208, %c0_53] : memref<256x32xbf16, #tpu.memory_space<vmem>>, vector<32x6xbf16>
    %cst_54 = arith.constant dense<0.000000e+00> : vector<16x6xf32>
    %86 = tpu.matmul %84, %85, %cst_54 {dimension_numbers = #tpu.dot_dimension_numbers<[1], [0], [0], [1], [0, 0, 1, 1], [], []>} : vector<16x32xbf16>, vector<32x6xbf16>, vector<16x6xf32> -> vector<16x6xf32>
    %c64 = arith.constant 64 : index
    %c0_55 = arith.constant 0 : index
    %87 = vector.load %arg6[%c64, %c0_55] : memref<80x32xf32, #tpu.memory_space<vmem>>, vector<1x6xf32>
    %88 = vector.broadcast %87 : vector<1x6xf32> to vector<16x6xf32>
    %89 = arith.addf %86, %88 : vector<16x6xf32>
    %cst_56 = arith.constant 0.000000e+00 : f32
    %90 = vector.broadcast %cst_56 : f32 to vector<16x6xf32>
    %91 = arith.maximumf %89, %90 : vector<16x6xf32>
    %92 = tpu.iota {dimensions = array<i32: 0>} : vector<2x16xi32>
    %93 = tpu.iota {dimensions = array<i32: 1>} : vector<2x16xi32>
    %c8_i32 = arith.constant 8 : i32
    %94 = vector.broadcast %c8_i32 : i32 to vector<2x16xi32>
    %95 = arith.muli %92, %94 : vector<2x16xi32>
    %96 = arith.cmpi sge, %93, %95 : vector<2x16xi32>
    %c8_i32_57 = arith.constant 8 : i32
    %97 = vector.broadcast %c8_i32_57 : i32 to vector<2x16xi32>
    %98 = arith.addi %95, %97 : vector<2x16xi32>
    %99 = arith.cmpi slt, %93, %98 : vector<2x16xi32>
    %100 = arith.andi %96, %99 : vector<2x16xi1>
    %cst_58 = arith.constant 1.000000e+00 : f32
    %cst_59 = arith.constant 0.000000e+00 : f32
    %101 = vector.broadcast %cst_58 : f32 to vector<2x16xf32>
    %102 = vector.broadcast %cst_59 : f32 to vector<2x16xf32>
    %103 = arith.select %100, %101, %102 : vector<2x16xi1>, vector<2x16xf32>
    %104 = arith.truncf %103 : vector<2x16xf32> to vector<2x16xbf16>
    %105 = arith.truncf %91 : vector<16x6xf32> to vector<16x6xbf16>
    %cst_60 = arith.constant dense<0.000000e+00> : vector<2x6xf32>
    %106 = tpu.matmul %104, %105, %cst_60 {dimension_numbers = #tpu.dot_dimension_numbers<[1], [0], [0], [1], [0, 0, 1, 1], [], []>} : vector<2x16xbf16>, vector<16x6xbf16>, vector<2x6xf32> -> vector<2x6xf32>
    %107 = arith.truncf %106 : vector<2x6xf32> to vector<2x6xbf16>
    %c240 = arith.constant 240 : index
    %c0_61 = arith.constant 0 : index
    %108 = vector.load %arg5[%c240, %c0_61] : memref<256x32xbf16, #tpu.memory_space<vmem>>, vector<6x2xbf16>
    %cst_62 = arith.constant dense<0.000000e+00> : vector<2x2xf32>
    %109 = tpu.matmul %107, %108, %cst_62 {dimension_numbers = #tpu.dot_dimension_numbers<[1], [0], [0], [1], [0, 0, 1, 1], [], []>} : vector<2x6xbf16>, vector<6x2xbf16>, vector<2x2xf32> -> vector<2x2xf32>
    %c72 = arith.constant 72 : index
    %c0_63 = arith.constant 0 : index
    %110 = vector.load %arg6[%c72, %c0_63] : memref<80x32xf32, #tpu.memory_space<vmem>>, vector<1x2xf32>
    %111 = vector.broadcast %110 : vector<1x2xf32> to vector<2x2xf32>
    %112 = arith.addf %109, %111 : vector<2x2xf32>
    %113 = tpu.concatenate %112, %106 in 1 : vector<2x2xf32>, vector<2x6xf32> -> vector<2x8xf32>
    %c0_64 = arith.constant 0 : index
    %c0_65 = arith.constant 0 : index
    %114 = vector.load %arg7[%c0_64, %c0_65] : memref<2x8xf32, #tpu.memory_space<vmem>>, vector<2x8xf32>
    tpu.vector_store %arg7[%c0_64, %c0_65], %113 {strides = array<i32>} : memref<2x8xf32, #tpu.memory_space<vmem>>, vector<2x8xf32>,
    return
  }
  func.func @transform_0(%arg0: i32) -> (i32, i32) {
    %c0_i32 = arith.constant 0 : i32
    %c0_i32_0 = arith.constant 0 : i32
    return %arg0, %c0_i32 : i32, i32
  }
  func.func @transform_1(%arg0: i32) -> (i32, i32) {
    %c0_i32 = arith.constant 0 : i32
    %c0_i32_0 = arith.constant 0 : i32
    return %arg0, %c0_i32 : i32, i32
  }
  func.func @transform_2(%arg0: i32) -> (i32, i32) {
    %c0_i32 = arith.constant 0 : i32
    %c0_i32_0 = arith.constant 0 : i32
    %c0_i32_1 = arith.constant 0 : i32
    return %c0_i32, %c0_i32_0 : i32, i32
  }
  func.func @transform_3(%arg0: i32) -> (i32, i32) {
    %c0_i32 = arith.constant 0 : i32
    %c0_i32_0 = arith.constant 0 : i32
    %c0_i32_1 = arith.constant 0 : i32
    return %c0_i32, %c0_i32_0 : i32, i32
  }
  func.func @transform_4(%arg0: i32) -> (i32, i32) {
    %c0_i32 = arith.constant 0 : i32
    %c0_i32_0 = arith.constant 0 : i32
    %c0_i32_1 = arith.constant 0 : i32
    return %c0_i32, %c0_i32_0 : i32, i32
  }
  func.func @transform_5(%arg0: i32) -> (i32, i32) {
    %c0_i32 = arith.constant 0 : i32
    %c0_i32_0 = arith.constant 0 : i32
    %c0_i32_1 = arith.constant 0 : i32
    return %c0_i32, %c0_i32_0 : i32, i32
  }
  func.func @transform_6(%arg0: i32) -> (i32, i32) {
    %c0_i32 = arith.constant 0 : i32
    %c0_i32_0 = arith.constant 0 : i32
    return %arg0, %c0_i32 : i32, i32
  }
}

</mosaic_0001>

<llo_original>
// kernel: tpu_custom_call.1
$region0: #{tpu_custom_call.1}
  #allocation0 [shape = 'u32[]', space=smem, size = 0x4, offset = 0x4, fixed_abs, tag = 'smem constant byte address 0x4 - core index']
  #allocation1 [shape = 'u32[144,128]{1,0:T(1,128)}', space=vmem, size = 0x12000, scoped, tag = 'internal scratch']
  %s0 = inlined_call_operand.vmem [shape: bf16[16,4], index: 0, kind: input, shape index: {}]
  %s1 = inlined_call_operand.vmem [shape: bf16[6,3], index: 1, kind: input, shape index: {}]
  %s2 = inlined_call_operand.vmem [shape: bf16[320,16], index: 2, kind: input, shape index: {}]
  %s3 = inlined_call_operand.vmem [shape: bf16[16,256], index: 3, kind: input, shape index: {}]
  %s4 = inlined_call_operand.vmem [shape: bf16[256,32], index: 4, kind: input, shape index: {}]
  %s5 = inlined_call_operand.vmem [shape: f32[80,32], index: 5, kind: input, shape index: {}]
  %s6 = inlined_call_operand.hbm [shape: f32[2,8], index: 6, kind: output, shape index: {}]
  %s7 = sld [smem:[#allocation0]]
  $region34: #{tpu_custom_call.1} parent=0
    _
  %s9 = ssub.s32 1, %s7
  %s10 = scalar_select 0, %s9, %s7
  $region1: #{tpu_custom_call.1} parent=0
    #allocation2 [shape = 'u8[1024]{0}', space=vmem, size = 0x400, scoped, tag = 'output window, operand 0, single buffered']
    #allocation3 [shape = 's32[1]{0}', space=sflag, size = 0x4, scoped, tag = 'scoped memory for tpu_custom_call.1']
    %11 = vsyncpa [#allocation3], 0
    // Predicated region
    $region2: #{tpu_custom_call.1} parent=1 // pred_check
      _
    $region3: #{tpu_custom_call.1} parent=1 // pred_check_branch
      %13 = sbr.rel (0) target = $region5
    $region4: #{tpu_custom_call.1} parent=1 // pred_region
      _
    $region5: #{tpu_custom_call.1} parent=1 // pred_fallthru
      _
    // Predicated region
    $region6: #{tpu_custom_call.1} parent=1 // pred_check
      _
    $region7: #{tpu_custom_call.1} parent=1 // pred_check_branch
      %15 = sbr.rel (0) target = $region9
    $region8: #{tpu_custom_call.1} parent=1 // pred_region
      _
    $region9: #{tpu_custom_call.1} parent=1 // pred_fallthru
      _
    // Predicated region
    $region10: #{tpu_custom_call.1} parent=1 // pred_check
      _
    $region11: #{tpu_custom_call.1} parent=1 // pred_check_branch
      %17 = sbr.rel (0) target = $region13
    $region12: #{tpu_custom_call.1} parent=1 // pred_region
      _
    $region13: #{tpu_custom_call.1} parent=1 // pred_fallthru
      _
    // Predicated region
    $region14: #{tpu_custom_call.1} parent=1 // pred_check
      _
    $region15: #{tpu_custom_call.1} parent=1 // pred_check_branch
      %19 = sbr.rel (0) target = $region17
    $region16: #{tpu_custom_call.1} parent=1 // pred_region
      _
    $region17: #{tpu_custom_call.1} parent=1 // pred_fallthru
      _
    // Predicated region
    $region18: #{tpu_custom_call.1} parent=1 // pred_check
      _
    $region19: #{tpu_custom_call.1} parent=1 // pred_check_branch
      %21 = sbr.rel (0) target = $region21
    $region20: #{tpu_custom_call.1} parent=1 // pred_region
      _
    $region21: #{tpu_custom_call.1} parent=1 // pred_fallthru
      _
    // Predicated region
    $region22: #{tpu_custom_call.1} parent=1 // pred_check
      _
    $region23: #{tpu_custom_call.1} parent=1 // pred_check_branch
      %23 = sbr.rel (0) target = $region25
    $region24: #{tpu_custom_call.1} parent=1 // pred_region
      _
    $region25: #{tpu_custom_call.1} parent=1 // pred_fallthru
      _
    %v25 = vld [vmem:[%s0] sm:$0xf]
    %v26 = vld [vmem:[%s0 + $0x4] sm:$0xf]
    %v27 = vld [vmem:[%s1] sm:$0x7]
    %v28 = vld [vmem:[%s2] sm:$0xf]
    %v29 = vld [vmem:[%s2 + $0x4] sm:$0xf]
    %v30 = vld [vmem:[%s2 + $0x8] sm:$0xf]
    %v31 = vld [vmem:[%s2 + $0xc] sm:$0xf]
    %v32 = vld [vmem:[%s2 + $0x10] sm:$0xf]
    %v33 = vld [vmem:[%s2 + $0x14] sm:$0xf]
    %v34 = vld [vmem:[%s2 + $0x18] sm:$0xf]
    %v35 = vld [vmem:[%s2 + $0x1c] sm:$0xf]
    %v36 = vld [vmem:[%s2 + $0x20] sm:$0xf]
    %v37 = vld [vmem:[%s2 + $0x24] sm:$0xf]
    %v38 = vld [vmem:[%s2 + $0x28] sm:$0xf]
    %v39 = vld [vmem:[%s2 + $0x2c] sm:$0xf]
    %v40 = vld [vmem:[%s2 + $0x30] sm:$0xf]
    %v41 = vld [vmem:[%s2 + $0x34] sm:$0xf]
    %v42 = vld [vmem:[%s2 + $0x38] sm:$0xf]
    %v43 = vld [vmem:[%s2 + $0x3c] sm:$0xf]
    %v44 = vld [vmem:[%s2 + $0x40] sm:$0xf]
    %v45 = vld [vmem:[%s2 + $0x44] sm:$0xf]
    %v46 = vld [vmem:[%s2 + $0x48] sm:$0xf]
    %v47 = vld [vmem:[%s2 + $0x4c] sm:$0xf]
    %v48 = vld [vmem:[%s2 + $0x50] sm:$0xf]
    %v49 = vld [vmem:[%s2 + $0x54] sm:$0xf]
    %v50 = vld [vmem:[%s2 + $0x58] sm:$0xf]
    %v51 = vld [vmem:[%s2 + $0x5c] sm:$0xf]
    %v52 = vld [vmem:[%s2 + $0x60] sm:$0xf]
    %v53 = vld [vmem:[%s2 + $0x64] sm:$0xf]
    %v54 = vld [vmem:[%s2 + $0x68] sm:$0xf]
    %v55 = vld [vmem:[%s2 + $0x6c] sm:$0xf]
    %v70 = vunpack.c.l.b16 %v28
    %v71 = vunpack.c.l.b16 %v29
    %v72 = vunpack.c.l.b16 %v30
    %v73 = vunpack.c.l.b16 %v31
    %v74 = vunpack.c.l.b16 %v32
    %v75 = vunpack.c.l.b16 %v33
    %v76 = vunpack.c.l.b16 %v34
    %v77 = vunpack.c.l.b16 %v35
    %v78 = vunpack.c.l.b16 %v36
    %v79 = vunpack.c.l.b16 %v37
    %v80 = vunpack.c.l.b16 %v38
    %v81 = vunpack.c.l.b16 %v39
    %v82 = vunpack.c.l.b16 %v40
    %v83 = vunpack.c.l.b16 %v41
    %v84 = vpack.c.b16 %v71, %v70
    %v85 = vpack.c.b16 %v73, %v72
    %v86 = vpack.c.b16 %v75, %v74
    %v87 = vpack.c.b16 %v77, %v76
    %v88 = vpack.c.b16 %v79, %v78
    %v89 = vpack.c.b16 %v81, %v80
    %v90 = vpack.c.b16 %v83, %v82
    %v93 = vunpack.c.l.b16 %v25
    %v94 = vunpack.c.l.b16 %v26
    %v95 = vpack.c.b16 %v94, %v93
    %vm97 = vcmask 130048
    %v99 = vsel %vm97, %v84, 0
    %v102 = vsel %vm97, %v85, 0
    %v105 = vsel %vm97, %v86, 0
    %v108 = vsel %vm97, %v87, 0
    %v111 = vsel %vm97, %v88, 0
    %v114 = vsel %vm97, %v89, 0
    %v117 = vsel %vm97, %v90, 0
    %119 = vmatprep.subr.bf16.mxu0 0
    %120 = vmatpush1.bf16.msra.mxu0 0
    %121 = vmatprep.subr.bf16.mxu0 0
    %122 = vmatpush1.bf16.msra.mxu0 0
    %123 = vmatprep.subr.bf16.mxu0 0
    %124 = vmatpush1.bf16.msra.mxu0 0
    %125 = vmatprep.subr.bf16.mxu0 0
    %126 = vmatpush1.bf16.msra.mxu0 0
    %127 = vmatprep.subr.bf16.mxu0 0
    %128 = vmatpush1.bf16.msra.mxu0 0
    %129 = vmatprep.subr.bf16.mxu0 0
    %130 = vmatpush1.bf16.msra.mxu0 0
    %131 = vmatprep.subr.bf16.mxu0 0
    %132 = vmatpush1.bf16.msra.mxu0 0
    %133 = vmatprep.subr.bf16.mxu0 0
    %134 = vmatpush1.bf16.msra.mxu0 %v95
    %135 = vmatprep.subr.bf16.mxu0 0
    %136 = vmatpush2.bf16.msra.mxu0 0
    %137 = vmatprep.subr.bf16.mxu0 0
    %138 = vmatpush2.bf16.msra.mxu0 0
    %139 = vmatprep.subr.bf16.mxu0 0
    %140 = vmatpush2.bf16.msra.mxu0 0
    %141 = vmatprep.subr.bf16.mxu0 0
    %142 = vmatpush2.bf16.msra.mxu0 0
    %143 = vmatprep.subr.bf16.mxu0 0
    %144 = vmatpush2.bf16.msra.mxu0 0
    %145 = vmatprep.subr.bf16.mxu0 0
    %146 = vmatpush2.bf16.msra.mxu0 0
    %147 = vmatprep.subr.bf16.mxu0 0
    %148 = vmatpush2.bf16.msra.mxu0 0
    %149 = vmatprep.subr.bf16.mxu0 0
    %150 = vmatpush2.bf16.msra.mxu0 0
    %151 = vmatprep.mubr.bf16.mxu0 0
    %152 = vmatmul.mubr.bf16.gmra.mxu0 %v99
    %v153 = vpop.f32.mrf.mxu0
    %v154 = vadd.f32 0.0, %v153
    %v155 = vpop.f32.mrf.mxu0
    %v156 = vpop.f32.mrf.mxu0
    %v157 = vadd.f32 0.0, %v156
    %v158 = vpop.f32.mrf.mxu0
    %159 = vmatprep.mubr.bf16.mxu0 0
    %160 = vmatmul.mubr.bf16.gmra.mxu0 %v102
    %v161 = vpop.f32.mrf.mxu0
    %v162 = vadd.f32 0.0, %v161
    %v163 = vpop.f32.mrf.mxu0
    %v164 = vpop.f32.mrf.mxu0
    %v165 = vadd.f32 0.0, %v164
    %v166 = vpop.f32.mrf.mxu0
    %167 = vmatprep.mubr.bf16.mxu0 0
    %168 = vmatmul.mubr.bf16.gmra.mxu0 %v105
    %v169 = vpop.f32.mrf.mxu0
    %v170 = vadd.f32 0.0, %v169
    %v171 = vpop.f32.mrf.mxu0
    %v172 = vpop.f32.mrf.mxu0
    %v173 = vadd.f32 0.0, %v172
    %v174 = vpop.f32.mrf.mxu0
    %175 = vmatprep.mubr.bf16.mxu0 0
    %176 = vmatmul.mubr.bf16.gmra.mxu0 %v108
    %v177 = vpop.f32.mrf.mxu0
    %v178 = vadd.f32 0.0, %v177
    %v179 = vpop.f32.mrf.mxu0
    %v180 = vpop.f32.mrf.mxu0
    %v181 = vadd.f32 0.0, %v180
    %v182 = vpop.f32.mrf.mxu0
    %183 = vmatprep.mubr.bf16.mxu0 0
    %184 = vmatmul.mubr.bf16.gmra.mxu0 %v111
    %v185 = vpop.f32.mrf.mxu0
    %v186 = vadd.f32 0.0, %v185
    %v187 = vpop.f32.mrf.mxu0
    %v188 = vpop.f32.mrf.mxu0
    %v189 = vadd.f32 0.0, %v188
    %v190 = vpop.f32.mrf.mxu0
    %191 = vmatprep.mubr.bf16.mxu0 0
    %192 = vmatmul.mubr.bf16.gmra.mxu0 %v114
    %v193 = vpop.f32.mrf.mxu0
    %v194 = vadd.f32 0.0, %v193
    %v195 = vpop.f32.mrf.mxu0
    %v196 = vpop.f32.mrf.mxu0
    %v197 = vadd.f32 0.0, %v196
    %v198 = vpop.f32.mrf.mxu0
    %199 = vmatprep.mubr.bf16.mxu0 0
    %200 = vmatmul.mubr.bf16.gmra.mxu0 %v117
    %v201 = vpop.f32.mrf.mxu0
    %v202 = vadd.f32 0.0, %v201
    %v203 = vpop.f32.mrf.mxu0
    %v204 = vpop.f32.mrf.mxu0
    %v205 = vadd.f32 0.0, %v204
    %v206 = vpop.f32.mrf.mxu0
    %207 = vdwg.mxu0
    %v222 = vunpack.c.l.b16 %v42
    %v223 = vunpack.c.l.b16 %v43
    %v224 = vunpack.c.l.b16 %v44
    %v225 = vunpack.c.l.b16 %v45
    %v226 = vunpack.c.l.b16 %v46
    %v227 = vunpack.c.l.b16 %v47
    %v228 = vunpack.c.l.b16 %v48
    %v229 = vunpack.c.l.b16 %v49
    %v230 = vunpack.c.l.b16 %v50
    %v231 = vunpack.c.l.b16 %v51
    %v232 = vunpack.c.l.b16 %v52
    %v233 = vunpack.c.l.b16 %v53
    %v234 = vunpack.c.l.b16 %v54
    %v235 = vunpack.c.l.b16 %v55
    %v236 = vpack.c.b16 %v223, %v222
    %v237 = vpack.c.b16 %v225, %v224
    %v238 = vpack.c.b16 %v227, %v226
    %v239 = vpack.c.b16 %v229, %v228
    %v240 = vpack.c.b16 %v231, %v230
    %v241 = vpack.c.b16 %v233, %v232
    %v242 = vpack.c.b16 %v235, %v234
    %v244 = vsel %vm97, %v236, 0
    %v247 = vsel %vm97, %v237, 0
    %v250 = vsel %vm97, %v238, 0
    %v253 = vsel %vm97, %v239, 0
    %v256 = vsel %vm97, %v240, 0
    %v259 = vsel %vm97, %v241, 0
    %v262 = vsel %vm97, %v242, 0
    %264 = vmatprep.subr.bf16.mxu0 0
    %265 = vmatpush1.bf16.msra.mxu0 0
    %266 = vmatprep.subr.bf16.mxu0 0
    %267 = vmatpush1.bf16.msra.mxu0 0
    %268 = vmatprep.subr.bf16.mxu0 0
    %269 = vmatpush1.bf16.msra.mxu0 0
    %270 = vmatprep.subr.bf16.mxu0 0
    %271 = vmatpush1.bf16.msra.mxu0 0
    %272 = vmatprep.subr.bf16.mxu0 0
    %273 = vmatpush1.bf16.msra.mxu0 0
    %274 = vmatprep.subr.bf16.mxu0 0
    %275 = vmatpush1.bf16.msra.mxu0 0
    %276 = vmatprep.subr.bf16.mxu0 0
    %277 = vmatpush1.bf16.msra.mxu0 0
    %278 = vmatprep.subr.bf16.mxu0 0
    %279 = vmatpush1.bf16.msra.mxu0 %v95
    %280 = vmatprep.subr.bf16.mxu0 0
    %281 = vmatpush2.bf16.msra.mxu0 0
    %282 = vmatprep.subr.bf16.mxu0 0
    %283 = vmatpush2.bf16.msra.mxu0 0
    %284 = vmatprep.subr.bf16.mxu0 0
    %285 = vmatpush2.bf16.msra.mxu0 0
    %286 = vmatprep.subr.bf16.mxu0 0
    %287 = vmatpush2.bf16.msra.mxu0 0
    %288 = vmatprep.subr.bf16.mxu0 0
    %289 = vmatpush2.bf16.msra.mxu0 0
    %290 = vmatprep.subr.bf16.mxu0 0
    %291 = vmatpush2.bf16.msra.mxu0 0
    %292 = vmatprep.subr.bf16.mxu0 0
    %293 = vmatpush2.bf16.msra.mxu0 0
    %294 = vmatprep.subr.bf16.mxu0 0
    %295 = vmatpush2.bf16.msra.mxu0 0
    %296 = vmatprep.mubr.bf16.mxu0 0
    %297 = vmatmul.mubr.bf16.gmra.mxu0 %v244
    %v298 = vpop.f32.mrf.mxu0
    %v299 = vadd.f32 0.0, %v298
    %v300 = vpop.f32.mrf.mxu0
    %v301 = vpop.f32.mrf.mxu0
    %v302 = vadd.f32 0.0, %v301
    %v303 = vpop.f32.mrf.mxu0
    %304 = vmatprep.mubr.bf16.mxu0 0
    %305 = vmatmul.mubr.bf16.gmra.mxu0 %v247
    %v306 = vpop.f32.mrf.mxu0
    %v307 = vadd.f32 0.0, %v306
    %v308 = vpop.f32.mrf.mxu0
    %v309 = vpop.f32.mrf.mxu0
    %v310 = vadd.f32 0.0, %v309
    %v311 = vpop.f32.mrf.mxu0
    %312 = vmatprep.mubr.bf16.mxu0 0
    %313 = vmatmul.mubr.bf16.gmra.mxu0 %v250
    %v314 = vpop.f32.mrf.mxu0
    %v315 = vadd.f32 0.0, %v314
    %v316 = vpop.f32.mrf.mxu0
    %v317 = vpop.f32.mrf.mxu0
    %v318 = vadd.f32 0.0, %v317
    %v319 = vpop.f32.mrf.mxu0
    %320 = vmatprep.mubr.bf16.mxu0 0
    %321 = vmatmul.mubr.bf16.gmra.mxu0 %v253
    %v322 = vpop.f32.mrf.mxu0
    %v323 = vadd.f32 0.0, %v322
    %v324 = vpop.f32.mrf.mxu0
    %v325 = vpop.f32.mrf.mxu0
    %v326 = vadd.f32 0.0, %v325
    %v327 = vpop.f32.mrf.mxu0
    %328 = vmatprep.mubr.bf16.mxu0 0
    %329 = vmatmul.mubr.bf16.gmra.mxu0 %v256
    %v330 = vpop.f32.mrf.mxu0
    %v331 = vadd.f32 0.0, %v330
    %v332 = vpop.f32.mrf.mxu0
    %v333 = vpop.f32.mrf.mxu0
    %v334 = vadd.f32 0.0, %v333
    %v335 = vpop.f32.mrf.mxu0
    %336 = vmatprep.mubr.bf16.mxu0 0
    %337 = vmatmul.mubr.bf16.gmra.mxu0 %v259
    %v338 = vpop.f32.mrf.mxu0
    %v339 = vadd.f32 0.0, %v338
    %v340 = vpop.f32.mrf.mxu0
    %v341 = vpop.f32.mrf.mxu0
    %v342 = vadd.f32 0.0, %v341
    %v343 = vpop.f32.mrf.mxu0
    %344 = vmatprep.mubr.bf16.mxu0 0
    %345 = vmatmul.mubr.bf16.gmra.mxu0 %v262
    %v346 = vpop.f32.mrf.mxu0
    %v347 = vadd.f32 0.0, %v346
    %v348 = vpop.f32.mrf.mxu0
    %v349 = vpop.f32.mrf.mxu0
    %v350 = vadd.f32 0.0, %v349
    %v351 = vpop.f32.mrf.mxu0
    %352 = vdwg.mxu0
    %367 = vrot.lane.b32.xlu0 %v299, 4
    %v368 = vpop.permute.xlu0 %367
    %369 = vrot.lane.b32.xlu0 %v302, 4
    %v370 = vpop.permute.xlu0 %369
    %371 = vrot.lane.b32.xlu0 %v307, 4
    %v372 = vpop.permute.xlu0 %371
    %373 = vrot.lane.b32.xlu0 %v310, 4
    %v374 = vpop.permute.xlu0 %373
    %375 = vrot.lane.b32.xlu0 %v315, 4
    %v376 = vpop.permute.xlu0 %375
    %377 = vrot.lane.b32.xlu0 %v318, 4
    %v378 = vpop.permute.xlu0 %377
    %379 = vrot.lane.b32.xlu0 %v323, 4
    %v380 = vpop.permute.xlu0 %379
    %381 = vrot.lane.b32.xlu0 %v326, 4
    %v382 = vpop.permute.xlu0 %381
    %383 = vrot.lane.b32.xlu0 %v331, 4
    %v384 = vpop.permute.xlu0 %383
    %385 = vrot.lane.b32.xlu0 %v334, 4
    %v386 = vpop.permute.xlu0 %385
    %387 = vrot.lane.b32.xlu0 %v339, 4
    %v388 = vpop.permute.xlu0 %387
    %389 = vrot.lane.b32.xlu0 %v342, 4
    %v390 = vpop.permute.xlu0 %389
    %391 = vrot.lane.b32.xlu0 %v347, 4
    %v392 = vpop.permute.xlu0 %391
    %393 = vrot.lane.b32.xlu0 %v350, 4
    %v394 = vpop.permute.xlu0 %393
    %vm409 = vcmask 31744
    %v410 = vsel %vm409, %v154, %v368
    %v411 = vsel %vm409, %v157, %v370
    %v412 = vsel %vm409, %v162, %v372
    %v413 = vsel %vm409, %v165, %v374
    %v414 = vsel %vm409, %v170, %v376
    %v415 = vsel %vm409, %v173, %v378
    %v416 = vsel %vm409, %v178, %v380
    %v417 = vsel %vm409, %v181, %v382
    %v418 = vsel %vm409, %v186, %v384
    %v419 = vsel %vm409, %v189, %v386
    %v420 = vsel %vm409, %v194, %v388
    %v421 = vsel %vm409, %v197, %v390
    %v422 = vsel %vm409, %v202, %v392
    %v423 = vsel %vm409, %v205, %v394
    %v424 = vpack.c.bf16 %v411, %v410
    %v425 = vpack.c.bf16 %v413, %v412
    %v426 = vpack.c.bf16 %v415, %v414
    %v427 = vpack.c.bf16 %v417, %v416
    %v428 = vpack.c.bf16 %v419, %v418
    %v429 = vpack.c.bf16 %v421, %v420
    %v430 = vpack.c.bf16 %v423, %v422
    %v431 = vld [vmem:[%s4] sm:$0xf]
    %v432 = vld [vmem:[%s5] sm:$0x1]
    %v433 = vlaneseq
    %v434 = vshrl.u32 %v433, 7
    %v435 = vsub.s32 0, %v434
    %v436 = vrot.slane %v432, %v435
    %vm437 = vcmask 64512
    %v439 = vsel %vm437, %v424, 0
    %v442 = vsel %vm437, %v425, 0
    %v445 = vsel %vm437, %v426, 0
    %v448 = vsel %vm437, %v427, 0
    %v451 = vsel %vm437, %v428, 0
    %v454 = vsel %vm437, %v429, 0
    %v457 = vsel %vm437, %v430, 0
    %vm459 = vcmask 1043456
    %v461 = vsel %vm459, %v431, 0
    %463 = vmatprep.subr.bf16.mxu0 0
    %464 = vmatpush1.bf16.msra.mxu0 0
    %465 = vmatprep.subr.bf16.mxu0 0
    %466 = vmatpush1.bf16.msra.mxu0 0
    %467 = vmatprep.subr.bf16.mxu0 0
    %468 = vmatpush1.bf16.msra.mxu0 0
    %469 = vmatprep.subr.bf16.mxu0 0
    %470 = vmatpush1.bf16.msra.mxu0 0
    %471 = vmatprep.subr.bf16.mxu0 0
    %472 = vmatpush1.bf16.msra.mxu0 0
    %473 = vmatprep.subr.bf16.mxu0 0
    %474 = vmatpush1.bf16.msra.mxu0 0
    %475 = vmatprep.subr.bf16.mxu0 0
    %476 = vmatpush1.bf16.msra.mxu0 0
    %477 = vmatprep.subr.bf16.mxu0 0
    %478 = vmatpush1.bf16.msra.mxu0 %v461
    %479 = vmatprep.subr.bf16.mxu0 0
    %480 = vmatpush2.bf16.msra.mxu0 0
    %481 = vmatprep.subr.bf16.mxu0 0
    %482 = vmatpush2.bf16.msra.mxu0 0
    %483 = vmatprep.subr.bf16.mxu0 0
    %484 = vmatpush2.bf16.msra.mxu0 0
    %485 = vmatprep.subr.bf16.mxu0 0
    %486 = vmatpush2.bf16.msra.mxu0 0
    %487 = vmatprep.subr.bf16.mxu0 0
    %488 = vmatpush2.bf16.msra.mxu0 0
    %489 = vmatprep.subr.bf16.mxu0 0
    %490 = vmatpush2.bf16.msra.mxu0 0
    %491 = vmatprep.subr.bf16.mxu0 0
    %492 = vmatpush2.bf16.msra.mxu0 0
    %493 = vmatprep.subr.bf16.mxu0 0
    %494 = vmatpush2.bf16.msra.mxu0 0
    %495 = vmatprep.mubr.bf16.mxu0 0
    %496 = vmatmul.mubr.bf16.gmra.mxu0 %v439
    %v497 = vpop.f32.mrf.mxu0
    %v498 = vadd.f32 %v436, %v497
    %v499 = vpop.f32.mrf.mxu0
    %v500 = vpop.f32.mrf.mxu0
    %v501 = vadd.f32 %v436, %v500
    %v502 = vpop.f32.mrf.mxu0
    %503 = vmatprep.mubr.bf16.mxu0 0
    %504 = vmatmul.mubr.bf16.gmra.mxu0 %v442
    %v505 = vpop.f32.mrf.mxu0
    %v506 = vadd.f32 %v436, %v505
    %v507 = vpop.f32.mrf.mxu0
    %v508 = vpop.f32.mrf.mxu0
    %v509 = vadd.f32 %v436, %v508
    %v510 = vpop.f32.mrf.mxu0
    %511 = vmatprep.mubr.bf16.mxu0 0
    %512 = vmatmul.mubr.bf16.gmra.mxu0 %v445
    %v513 = vpop.f32.mrf.mxu0
    %v514 = vadd.f32 %v436, %v513
    %v515 = vpop.f32.mrf.mxu0
    %v516 = vpop.f32.mrf.mxu0
    %v517 = vadd.f32 %v436, %v516
    %v518 = vpop.f32.mrf.mxu0
    %519 = vmatprep.mubr.bf16.mxu0 0
    %520 = vmatmul.mubr.bf16.gmra.mxu0 %v448
    %v521 = vpop.f32.mrf.mxu0
    %v522 = vadd.f32 %v436, %v521
    %v523 = vpop.f32.mrf.mxu0
    %v524 = vpop.f32.mrf.mxu0
    %v525 = vadd.f32 %v436, %v524
    %v526 = vpop.f32.mrf.mxu0
    %527 = vmatprep.mubr.bf16.mxu0 0
    %528 = vmatmul.mubr.bf16.gmra.mxu0 %v451
    %v529 = vpop.f32.mrf.mxu0
    %v530 = vadd.f32 %v436, %v529
    %v531 = vpop.f32.mrf.mxu0
    %v532 = vpop.f32.mrf.mxu0
    %v533 = vadd.f32 %v436, %v532
    %v534 = vpop.f32.mrf.mxu0
    %535 = vmatprep.mubr.bf16.mxu0 0
    %536 = vmatmul.mubr.bf16.gmra.mxu0 %v454
    %v537 = vpop.f32.mrf.mxu0
    %v538 = vadd.f32 %v436, %v537
    %v539 = vpop.f32.mrf.mxu0
    %v540 = vpop.f32.mrf.mxu0
    %v541 = vadd.f32 %v436, %v540
    %v542 = vpop.f32.mrf.mxu0
    %543 = vmatprep.mubr.bf16.mxu0 0
    %544 = vmatmul.mubr.bf16.gmra.mxu0 %v457
    %v545 = vpop.f32.mrf.mxu0
    %v546 = vadd.f32 %v436, %v545
    %v547 = vpop.f32.mrf.mxu0
    %v548 = vpop.f32.mrf.mxu0
    %v549 = vadd.f32 %v436, %v548
    %v550 = vpop.f32.mrf.mxu0
    %551 = vdwg.mxu0
    %v552 = vmax.f32 %v498, 0.0
    %v553 = vmax.f32 %v501, 0.0
    %v554 = vmax.f32 %v506, 0.0
    %v555 = vmax.f32 %v509, 0.0
    %v556 = vmax.f32 %v514, 0.0
    %v557 = vmax.f32 %v517, 0.0
    %v558 = vmax.f32 %v522, 0.0
    %v559 = vmax.f32 %v525, 0.0
    %v560 = vmax.f32 %v530, 0.0
    %v561 = vmax.f32 %v533, 0.0
    %v562 = vmax.f32 %v538, 0.0
    %v563 = vmax.f32 %v541, 0.0
    %v564 = vmax.f32 %v546, 0.0
    %v565 = vmax.f32 %v549, 0.0
    %v566 = vpack.c.bf16 %v553, %v552
    %v567 = vpack.c.bf16 %v555, %v554
    %v568 = vpack.c.bf16 %v557, %v556
    %v569 = vpack.c.bf16 %v559, %v558
    %v570 = vpack.c.bf16 %v561, %v560
    %v571 = vpack.c.bf16 %v563, %v562
    %v572 = vpack.c.bf16 %v565, %v564
    %v573 = vld [vmem:[%s4 + $0x8] sm:$0xf]
    %v574 = vld [vmem:[%s4 + $0xc] sm:$0xf]
    %v575 = vld [vmem:[%s4 + $0x10] sm:$0xf]
    %v576 = vld [vmem:[%s4 + $0x14] sm:$0xf]
    %v577 = vld [vmem:[%s5 + $0x8] sm:$0x1]
    %v578 = vlaneseq
    %v579 = vshrl.u32 %v578, 7
    %v580 = vsub.s32 0, %v579
    %v581 = vrot.slane %v577, %v580
    %v586 = vunpack.c.l.b16 %v573
    %v587 = vunpack.c.l.b16 %v574
    %v588 = vunpack.c.l.b16 %v575
    %v589 = vunpack.c.l.b16 %v576
    %v590 = vpack.c.b16 %v587, %v586
    %v591 = vpack.c.b16 %v589, %v588
    %vm594 = vcmask 261120
    %v596 = vsel %vm594, %v566, 0
    %v599 = vsel %vm594, %v567, 0
    %v602 = vsel %vm594, %v568, 0
    %v605 = vsel %vm594, %v569, 0
    %v608 = vsel %vm594, %v570, 0
    %v611 = vsel %vm594, %v571, 0
    %v614 = vsel %vm594, %v572, 0
    %616 = vmatprep.subr.bf16.mxu0 0
    %617 = vmatpush1.bf16.msra.mxu0 0
    %618 = vmatprep.subr.bf16.mxu0 0
    %619 = vmatpush1.bf16.msra.mxu0 0
    %620 = vmatprep.subr.bf16.mxu0 0
    %621 = vmatpush1.bf16.msra.mxu0 0
    %622 = vmatprep.subr.bf16.mxu0 0
    %623 = vmatpush1.bf16.msra.mxu0 0
    %624 = vmatprep.subr.bf16.mxu0 0
    %625 = vmatpush1.bf16.msra.mxu0 0
    %626 = vmatprep.subr.bf16.mxu0 0
    %627 = vmatpush1.bf16.msra.mxu0 0
    %628 = vmatprep.subr.bf16.mxu0 0
    %629 = vmatpush1.bf16.msra.mxu0 %v591
    %630 = vmatprep.subr.bf16.mxu0 0
    %631 = vmatpush1.bf16.msra.mxu0 %v590
    %632 = vmatprep.subr.bf16.mxu0 0
    %633 = vmatpush2.bf16.msra.mxu0 0
    %634 = vmatprep.subr.bf16.mxu0 0
    %635 = vmatpush2.bf16.msra.mxu0 0
    %636 = vmatprep.subr.bf16.mxu0 0
    %637 = vmatpush2.bf16.msra.mxu0 0
    %638 = vmatprep.subr.bf16.mxu0 0
    %639 = vmatpush2.bf16.msra.mxu0 0
    %640 = vmatprep.subr.bf16.mxu0 0
    %641 = vmatpush2.bf16.msra.mxu0 0
    %642 = vmatprep.subr.bf16.mxu0 0
    %643 = vmatpush2.bf16.msra.mxu0 0
    %644 = vmatprep.subr.bf16.mxu0 0
    %645 = vmatpush2.bf16.msra.mxu0 0
    %646 = vmatprep.subr.bf16.mxu0 0
    %647 = vmatpush2.bf16.msra.mxu0 0
    %648 = vmatprep.mubr.bf16.mxu0 0
    %649 = vmatmul.mubr.bf16.gmra.mxu0 %v596
    %v650 = vpop.f32.mrf.mxu0
    %v651 = vadd.f32 %v581, %v650
    %v652 = vpop.f32.mrf.mxu0
    %v653 = vpop.f32.mrf.mxu0
    %v654 = vadd.f32 %v581, %v653
    %v655 = vpop.f32.mrf.mxu0
    %656 = vmatprep.mubr.bf16.mxu0 0
    %657 = vmatmul.mubr.bf16.gmra.mxu0 %v599
    %v658 = vpop.f32.mrf.mxu0
    %v659 = vadd.f32 %v581, %v658
    %v660 = vpop.f32.mrf.mxu0
    %v661 = vpop.f32.mrf.mxu0
    %v662 = vadd.f32 %v581, %v661
    %v663 = vpop.f32.mrf.mxu0
    %664 = vmatprep.mubr.bf16.mxu0 0
    %665 = vmatmul.mubr.bf16.gmra.mxu0 %v602
    %v666 = vpop.f32.mrf.mxu0
    %v667 = vadd.f32 %v581, %v666
    %v668 = vpop.f32.mrf.mxu0
    %v669 = vpop.f32.mrf.mxu0
    %v670 = vadd.f32 %v581, %v669
    %v671 = vpop.f32.mrf.mxu0
    %672 = vmatprep.mubr.bf16.mxu0 0
    %673 = vmatmul.mubr.bf16.gmra.mxu0 %v605
    %v674 = vpop.f32.mrf.mxu0
    %v675 = vadd.f32 %v581, %v674
    %v676 = vpop.f32.mrf.mxu0
    %v677 = vpop.f32.mrf.mxu0
    %v678 = vadd.f32 %v581, %v677
    %v679 = vpop.f32.mrf.mxu0
    %680 = vmatprep.mubr.bf16.mxu0 0
    %681 = vmatmul.mubr.bf16.gmra.mxu0 %v608
    %v682 = vpop.f32.mrf.mxu0
    %v683 = vadd.f32 %v581, %v682
    %v684 = vpop.f32.mrf.mxu0
    %v685 = vpop.f32.mrf.mxu0
    %v686 = vadd.f32 %v581, %v685
    %v687 = vpop.f32.mrf.mxu0
    %688 = vmatprep.mubr.bf16.mxu0 0
    %689 = vmatmul.mubr.bf16.gmra.mxu0 %v611
    %v690 = vpop.f32.mrf.mxu0
    %v691 = vadd.f32 %v581, %v690
    %v692 = vpop.f32.mrf.mxu0
    %v693 = vpop.f32.mrf.mxu0
    %v694 = vadd.f32 %v581, %v693
    %v695 = vpop.f32.mrf.mxu0
    %696 = vmatprep.mubr.bf16.mxu0 0
    %697 = vmatmul.mubr.bf16.gmra.mxu0 %v614
    %v698 = vpop.f32.mrf.mxu0
    %v699 = vadd.f32 %v581, %v698
    %v700 = vpop.f32.mrf.mxu0
    %v701 = vpop.f32.mrf.mxu0
    %v702 = vadd.f32 %v581, %v701
    %v703 = vpop.f32.mrf.mxu0
    %704 = vdwg.mxu0
    %v705 = vmax.f32 %v651, 0.0
    %v706 = vmax.f32 %v654, 0.0
    %v707 = vmax.f32 %v659, 0.0
    %v708 = vmax.f32 %v662, 0.0
    %v709 = vmax.f32 %v667, 0.0
    %v710 = vmax.f32 %v670, 0.0
    %v711 = vmax.f32 %v675, 0.0
    %v712 = vmax.f32 %v678, 0.0
    %v713 = vmax.f32 %v683, 0.0
    %v714 = vmax.f32 %v686, 0.0
    %v715 = vmax.f32 %v691, 0.0
    %v716 = vmax.f32 %v694, 0.0
    %v717 = vmax.f32 %v699, 0.0
    %v718 = vmax.f32 %v702, 0.0
    %v719 = vpack.c.bf16 %v706, %v705
    %v720 = vpack.c.bf16 %v708, %v707
    %v721 = vpack.c.bf16 %v710, %v709
    %v722 = vpack.c.bf16 %v712, %v711
    %v723 = vpack.c.bf16 %v714, %v713
    %v724 = vpack.c.bf16 %v716, %v715
    %v725 = vpack.c.bf16 %v718, %v717
    %v726 = vld [vmem:[%s4 + $0x18] sm:$0xf]
    %v727 = vld [vmem:[%s4 + $0x1c] sm:$0xf]
    %v728 = vld [vmem:[%s4 + $0x20] sm:$0xf]
    %v729 = vld [vmem:[%s4 + $0x24] sm:$0xf]
    %v730 = vld [vmem:[%s5 + $0x10] sm:$0x1]
    %v731 = vlaneseq
    %v732 = vshrl.u32 %v731, 7
    %v733 = vsub.s32 0, %v732
    %v734 = vrot.slane %v730, %v733
    %v739 = vunpack.c.l.b16 %v726
    %v740 = vunpack.c.l.b16 %v727
    %v741 = vunpack.c.l.b16 %v728
    %v742 = vunpack.c.l.b16 %v729
    %v743 = vpack.c.b16 %v740, %v739
    %v744 = vpack.c.b16 %v742, %v741
    %v748 = vsel %vm594, %v719, 0
    %v751 = vsel %vm594, %v720, 0
    %v754 = vsel %vm594, %v721, 0
    %v757 = vsel %vm594, %v722, 0
    %v760 = vsel %vm594, %v723, 0
    %v763 = vsel %vm594, %v724, 0
    %v766 = vsel %vm594, %v725, 0
    %768 = vmatprep.subr.bf16.mxu0 0
    %769 = vmatpush1.bf16.msra.mxu0 0
    %770 = vmatprep.subr.bf16.mxu0 0
    %771 = vmatpush1.bf16.msra.mxu0 0
    %772 = vmatprep.subr.bf16.mxu0 0
    %773 = vmatpush1.bf16.msra.mxu0 0
    %774 = vmatprep.subr.bf16.mxu0 0
    %775 = vmatpush1.bf16.msra.mxu0 0
    %776 = vmatprep.subr.bf16.mxu0 0
    %777 = vmatpush1.bf16.msra.mxu0 0
    %778 = vmatprep.subr.bf16.mxu0 0
    %779 = vmatpush1.bf16.msra.mxu0 0
    %780 = vmatprep.subr.bf16.mxu0 0
    %781 = vmatpush1.bf16.msra.mxu0 %v744
    %782 = vmatprep.subr.bf16.mxu0 0
    %783 = vmatpush1.bf16.msra.mxu0 %v743
    %784 = vmatprep.subr.bf16.mxu0 0
    %785 = vmatpush2.bf16.msra.mxu0 0
    %786 = vmatprep.subr.bf16.mxu0 0
    %787 = vmatpush2.bf16.msra.mxu0 0
    %788 = vmatprep.subr.bf16.mxu0 0
    %789 = vmatpush2.bf16.msra.mxu0 0
    %790 = vmatprep.subr.bf16.mxu0 0
    %791 = vmatpush2.bf16.msra.mxu0 0
    %792 = vmatprep.subr.bf16.mxu0 0
    %793 = vmatpush2.bf16.msra.mxu0 0
    %794 = vmatprep.subr.bf16.mxu0 0
    %795 = vmatpush2.bf16.msra.mxu0 0
    %796 = vmatprep.subr.bf16.mxu0 0
    %797 = vmatpush2.bf16.msra.mxu0 0
    %798 = vmatprep.subr.bf16.mxu0 0
    %799 = vmatpush2.bf16.msra.mxu0 0
    %800 = vmatprep.mubr.bf16.mxu0 0
    %801 = vmatmul.mubr.bf16.gmra.mxu0 %v748
    %v802 = vpop.f32.mrf.mxu0
    %v803 = vadd.f32 %v734, %v802
    %v804 = vpop.f32.mrf.mxu0
    %v805 = vpop.f32.mrf.mxu0
    %v806 = vadd.f32 %v734, %v805
    %v807 = vpop.f32.mrf.mxu0
    %808 = vmatprep.mubr.bf16.mxu0 0
    %809 = vmatmul.mubr.bf16.gmra.mxu0 %v751
    %v810 = vpop.f32.mrf.mxu0
    %v811 = vadd.f32 %v734, %v810
    %v812 = vpop.f32.mrf.mxu0
    %v813 = vpop.f32.mrf.mxu0
    %v814 = vadd.f32 %v734, %v813
    %v815 = vpop.f32.mrf.mxu0
    %816 = vmatprep.mubr.bf16.mxu0 0
    %817 = vmatmul.mubr.bf16.gmra.mxu0 %v754
    %v818 = vpop.f32.mrf.mxu0
    %v819 = vadd.f32 %v734, %v818
    %v820 = vpop.f32.mrf.mxu0
    %v821 = vpop.f32.mrf.mxu0
    %v822 = vadd.f32 %v734, %v821
    %v823 = vpop.f32.mrf.mxu0
    %824 = vmatprep.mubr.bf16.mxu0 0
    %825 = vmatmul.mubr.bf16.gmra.mxu0 %v757
    %v826 = vpop.f32.mrf.mxu0
    %v827 = vadd.f32 %v734, %v826
    %v828 = vpop.f32.mrf.mxu0
    %v829 = vpop.f32.mrf.mxu0
    %v830 = vadd.f32 %v734, %v829
    %v831 = vpop.f32.mrf.mxu0
    %832 = vmatprep.mubr.bf16.mxu0 0
    %833 = vmatmul.mubr.bf16.gmra.mxu0 %v760
    %v834 = vpop.f32.mrf.mxu0
    %v835 = vadd.f32 %v734, %v834
    %v836 = vpop.f32.mrf.mxu0
    %v837 = vpop.f32.mrf.mxu0
    %v838 = vadd.f32 %v734, %v837
    %v839 = vpop.f32.mrf.mxu0
    %840 = vmatprep.mubr.bf16.mxu0 0
    %841 = vmatmul.mubr.bf16.gmra.mxu0 %v763
    %v842 = vpop.f32.mrf.mxu0
    %v843 = vadd.f32 %v734, %v842
    %v844 = vpop.f32.mrf.mxu0
    %v845 = vpop.f32.mrf.mxu0
    %v846 = vadd.f32 %v734, %v845
    %v847 = vpop.f32.mrf.mxu0
    %848 = vmatprep.mubr.bf16.mxu0 0
    %849 = vmatmul.mubr.bf16.gmra.mxu0 %v766
    %v850 = vpop.f32.mrf.mxu0
    %v851 = vadd.f32 %v734, %v850
    %v852 = vpop.f32.mrf.mxu0
    %v853 = vpop.f32.mrf.mxu0
    %v854 = vadd.f32 %v734, %v853
    %v855 = vpop.f32.mrf.mxu0
    %856 = vdwg.mxu0
    %v857 = vmax.f32 %v803, 0.0
    %v858 = vmax.f32 %v806, 0.0
    %v859 = vmax.f32 %v811, 0.0
    %v860 = vmax.f32 %v814, 0.0
    %v861 = vmax.f32 %v819, 0.0
    %v862 = vmax.f32 %v822, 0.0
    %v863 = vmax.f32 %v827, 0.0
    %v864 = vmax.f32 %v830, 0.0
    %v865 = vmax.f32 %v835, 0.0
    %v866 = vmax.f32 %v838, 0.0
    %v867 = vmax.f32 %v843, 0.0
    %v868 = vmax.f32 %v846, 0.0
    %v869 = vmax.f32 %v851, 0.0
    %v870 = vmax.f32 %v854, 0.0
    %v871 = vld [vmem:[%s3] sm:$0xf]
    %v872 = vld [vmem:[%s3 + $0x8] sm:$0xf]
    %v873 = vpack.c.bf16 %v858, %v857
    %v874 = vpack.c.bf16 %v860, %v859
    %v875 = vpack.c.bf16 %v862, %v861
    %v876 = vpack.c.bf16 %v864, %v863
    %v877 = vpack.c.bf16 %v866, %v865
    %v878 = vpack.c.bf16 %v868, %v867
    %v879 = vpack.c.bf16 %v870, %v869
    %v882 = vunpack.c.l.b16 %v871
    %v883 = vunpack.c.l.b16 %v872
    %v884 = vpack.c.b16 %v883, %v882
    %vm885 = vcmask 916480
    %v887 = vsel %vm885, %v884, 0
    %889 = vmatprep.subr.bf16.mxu0 0
    %890 = vmatpush1.bf16.msra.mxu0 0
    %891 = vmatprep.subr.bf16.mxu0 0
    %892 = vmatpush1.bf16.msra.mxu0 %v879
    %893 = vmatprep.subr.bf16.mxu0 0
    %894 = vmatpush1.bf16.msra.mxu0 %v878
    %895 = vmatprep.subr.bf16.mxu0 0
    %896 = vmatpush1.bf16.msra.mxu0 %v877
    %897 = vmatprep.subr.bf16.mxu0 0
    %898 = vmatpush1.bf16.msra.mxu0 %v876
    %899 = vmatprep.subr.bf16.mxu0 0
    %900 = vmatpush1.bf16.msra.mxu0 %v875
    %901 = vmatprep.subr.bf16.mxu0 0
    %902 = vmatpush1.bf16.msra.mxu0 %v874
    %903 = vmatprep.subr.bf16.mxu0 0
    %904 = vmatpush1.bf16.msra.mxu0 %v873
    %905 = vmatprep.subr.bf16.mxu0 0
    %906 = vmatpush2.bf16.msra.mxu0 0
    %907 = vmatprep.subr.bf16.mxu0 0
    %908 = vmatpush2.bf16.msra.mxu0 0
    %909 = vmatprep.subr.bf16.mxu0 0
    %910 = vmatpush2.bf16.msra.mxu0 0
    %911 = vmatprep.subr.bf16.mxu0 0
    %912 = vmatpush2.bf16.msra.mxu0 0
    %913 = vmatprep.subr.bf16.mxu0 0
    %914 = vmatpush2.bf16.msra.mxu0 0
    %915 = vmatprep.subr.bf16.mxu0 0
    %916 = vmatpush2.bf16.msra.mxu0 0
    %917 = vmatprep.subr.bf16.mxu0 0
    %918 = vmatpush2.bf16.msra.mxu0 0
    %919 = vmatprep.subr.bf16.mxu0 0
    %920 = vmatpush2.bf16.msra.mxu0 0
    %921 = vmatprep.mubr.bf16.mxu0 0
    %922 = vmatmul.mubr.bf16.gmra.mxu0 %v887
    %v923 = vpop.f32.mrf.mxu0
    %v924 = vadd.f32 0.0, %v923
    %v925 = vpop.f32.mrf.mxu0
    %v926 = vpop.f32.mrf.mxu0
    %v927 = vadd.f32 0.0, %v926
    %v928 = vpop.f32.mrf.mxu0
    %929 = vdwg.mxu0
    %v930 = vld [vmem:[%s2 + $0x70] sm:$0xf]
    %v931 = vld [vmem:[%s2 + $0x74] sm:$0xf]
    %v932 = vld [vmem:[%s2 + $0x78] sm:$0xf]
    %v933 = vld [vmem:[%s2 + $0x7c] sm:$0xf]
    %v934 = vld [vmem:[%s2 + $0x80] sm:$0xf]
    %v935 = vld [vmem:[%s2 + $0x84] sm:$0xf]
    %v936 = vld [vmem:[%s2 + $0x88] sm:$0xf]
    %v937 = vld [vmem:[%s2 + $0x8c] sm:$0xf]
    %v938 = vld [vmem:[%s2 + $0x90] sm:$0xf]
    %v939 = vld [vmem:[%s2 + $0x94] sm:$0xf]
    %v940 = vld [vmem:[%s2 + $0x98] sm:$0xf]
    %v941 = vld [vmem:[%s2 + $0x9c] sm:$0xf]
    %v948 = vunpack.c.l.b16 %v930
    %v949 = vunpack.c.l.b16 %v931
    %v950 = vunpack.c.l.b16 %v932
    %v951 = vunpack.c.l.b16 %v933
    %v952 = vunpack.c.l.b16 %v934
    %v953 = vunpack.c.l.b16 %v935
    %v954 = vpack.c.b16 %v949, %v948
    %v955 = vpack.c.b16 %v951, %v950
    %v956 = vpack.c.b16 %v953, %v952
    %v958 = vsel %vm97, %v954, 0
    %v961 = vsel %vm97, %v955, 0
    %v964 = vsel %vm97, %v956, 0
    %966 = vmatprep.subr.bf16.mxu0 0
    %967 = vmatpush1.bf16.msra.mxu0 0
    %968 = vmatprep.subr.bf16.mxu0 0
    %969 = vmatpush1.bf16.msra.mxu0 0
    %970 = vmatprep.subr.bf16.mxu0 0
    %971 = vmatpush1.bf16.msra.mxu0 0
    %972 = vmatprep.subr.bf16.mxu0 0
    %973 = vmatpush1.bf16.msra.mxu0 0
    %974 = vmatprep.subr.bf16.mxu0 0
    %975 = vmatpush1.bf16.msra.mxu0 0
    %976 = vmatprep.subr.bf16.mxu0 0
    %977 = vmatpush1.bf16.msra.mxu0 0
    %978 = vmatprep.subr.bf16.mxu0 0
    %979 = vmatpush1.bf16.msra.mxu0 0
    %980 = vmatprep.subr.bf16.mxu0 0
    %981 = vmatpush1.bf16.msra.mxu0 %v95
    %982 = vmatprep.subr.bf16.mxu0 0
    %983 = vmatpush2.bf16.msra.mxu0 0
    %984 = vmatprep.subr.bf16.mxu0 0
    %985 = vmatpush2.bf16.msra.mxu0 0
    %986 = vmatprep.subr.bf16.mxu0 0
    %987 = vmatpush2.bf16.msra.mxu0 0
    %988 = vmatprep.subr.bf16.mxu0 0
    %989 = vmatpush2.bf16.msra.mxu0 0
    %990 = vmatprep.subr.bf16.mxu0 0
    %991 = vmatpush2.bf16.msra.mxu0 0
    %992 = vmatprep.subr.bf16.mxu0 0
    %993 = vmatpush2.bf16.msra.mxu0 0
    %994 = vmatprep.subr.bf16.mxu0 0
    %995 = vmatpush2.bf16.msra.mxu0 0
    %996 = vmatprep.subr.bf16.mxu0 0
    %997 = vmatpush2.bf16.msra.mxu0 0
    %998 = vmatprep.mubr.bf16.mxu0 0
    %999 = vmatmul.mubr.bf16.gmra.mxu0 %v958
    %v1000 = vpop.f32.mrf.mxu0
    %v1001 = vadd.f32 0.0, %v1000
    %v1002 = vpop.f32.mrf.mxu0
    %v1003 = vpop.f32.mrf.mxu0
    %v1004 = vadd.f32 0.0, %v1003
    %v1005 = vpop.f32.mrf.mxu0
    %1006 = vmatprep.mubr.bf16.mxu0 0
    %1007 = vmatmul.mubr.bf16.gmra.mxu0 %v961
    %v1008 = vpop.f32.mrf.mxu0
    %v1009 = vadd.f32 0.0, %v1008
    %v1010 = vpop.f32.mrf.mxu0
    %v1011 = vpop.f32.mrf.mxu0
    %v1012 = vadd.f32 0.0, %v1011
    %v1013 = vpop.f32.mrf.mxu0
    %1014 = vmatprep.mubr.bf16.mxu0 0
    %1015 = vmatmul.mubr.bf16.gmra.mxu0 %v964
    %v1016 = vpop.f32.mrf.mxu0
    %v1017 = vadd.f32 0.0, %v1016
    %v1018 = vpop.f32.mrf.mxu0
    %v1019 = vpop.f32.mrf.mxu0
    %v1020 = vadd.f32 0.0, %v1019
    %v1021 = vpop.f32.mrf.mxu0
    %1022 = vdwg.mxu0
    %v1029 = vunpack.c.l.b16 %v936
    %v1030 = vunpack.c.l.b16 %v937
    %v1031 = vunpack.c.l.b16 %v938
    %v1032 = vunpack.c.l.b16 %v939
    %v1033 = vunpack.c.l.b16 %v940
    %v1034 = vunpack.c.l.b16 %v941
    %v1035 = vpack.c.b16 %v1030, %v1029
    %v1036 = vpack.c.b16 %v1032, %v1031
    %v1037 = vpack.c.b16 %v1034, %v1033
    %vm1038 = vcmask 48128
    %v1040 = vsel %vm1038, %v1035, 0
    %v1043 = vsel %vm1038, %v1036, 0
    %v1046 = vsel %vm1038, %v1037, 0
    %vm1048 = vcmask 1042432
    %v1050 = vsel %vm1048, %v27, 0
    %1052 = vmatprep.subr.bf16.mxu0 0
    %1053 = vmatpush1.bf16.msra.mxu0 0
    %1054 = vmatprep.subr.bf16.mxu0 0
    %1055 = vmatpush1.bf16.msra.mxu0 0
    %1056 = vmatprep.subr.bf16.mxu0 0
    %1057 = vmatpush1.bf16.msra.mxu0 0
    %1058 = vmatprep.subr.bf16.mxu0 0
    %1059 = vmatpush1.bf16.msra.mxu0 0
    %1060 = vmatprep.subr.bf16.mxu0 0
    %1061 = vmatpush1.bf16.msra.mxu0 0
    %1062 = vmatprep.subr.bf16.mxu0 0
    %1063 = vmatpush1.bf16.msra.mxu0 0
    %1064 = vmatprep.subr.bf16.mxu0 0
    %1065 = vmatpush1.bf16.msra.mxu0 0
    %1066 = vmatprep.subr.bf16.mxu0 0
    %1067 = vmatpush1.bf16.msra.mxu0 %v1050
    %1068 = vmatprep.subr.bf16.mxu0 0
    %1069 = vmatpush2.bf16.msra.mxu0 0
    %1070 = vmatprep.subr.bf16.mxu0 0
    %1071 = vmatpush2.bf16.msra.mxu0 0
    %1072 = vmatprep.subr.bf16.mxu0 0
    %1073 = vmatpush2.bf16.msra.mxu0 0
    %1074 = vmatprep.subr.bf16.mxu0 0
    %1075 = vmatpush2.bf16.msra.mxu0 0
    %1076 = vmatprep.subr.bf16.mxu0 0
    %1077 = vmatpush2.bf16.msra.mxu0 0
    %1078 = vmatprep.subr.bf16.mxu0 0
    %1079 = vmatpush2.bf16.msra.mxu0 0
    %1080 = vmatprep.subr.bf16.mxu0 0
    %1081 = vmatpush2.bf16.msra.mxu0 0
    %1082 = vmatprep.subr.bf16.mxu0 0
    %1083 = vmatpush2.bf16.msra.mxu0 0
    %1084 = vmatprep.mubr.bf16.mxu0 0
    %1085 = vmatmul.mubr.bf16.gmra.mxu0 %v1040
    %v1086 = vpop.f32.mrf.mxu0
    %v1087 = vadd.f32 0.0, %v1086
    %v1088 = vpop.f32.mrf.mxu0
    %v1089 = vpop.f32.mrf.mxu0
    %v1090 = vadd.f32 0.0, %v1089
    %v1091 = vpop.f32.mrf.mxu0
    %1092 = vmatprep.mubr.bf16.mxu0 0
    %1093 = vmatmul.mubr.bf16.gmra.mxu0 %v1043
    %v1094 = vpop.f32.mrf.mxu0
    %v1095 = vadd.f32 0.0, %v1094
    %v1096 = vpop.f32.mrf.mxu0
    %v1097 = vpop.f32.mrf.mxu0
    %v1098 = vadd.f32 0.0, %v1097
    %v1099 = vpop.f32.mrf.mxu0
    %1100 = vmatprep.mubr.bf16.mxu0 0
    %1101 = vmatmul.mubr.bf16.gmra.mxu0 %v1046
    %v1102 = vpop.f32.mrf.mxu0
    %v1103 = vadd.f32 0.0, %v1102
    %v1104 = vpop.f32.mrf.mxu0
    %v1105 = vpop.f32.mrf.mxu0
    %v1106 = vadd.f32 0.0, %v1105
    %v1107 = vpop.f32.mrf.mxu0
    %1108 = vdwg.mxu0
    %1115 = vrot.lane.b32.xlu0 %v1087, 4
    %v1116 = vpop.permute.xlu0 %1115
    %1117 = vrot.lane.b32.xlu0 %v1090, 4
    %v1118 = vpop.permute.xlu0 %1117
    %1119 = vrot.lane.b32.xlu0 %v1095, 4
    %v1120 = vpop.permute.xlu0 %1119
    %1121 = vrot.lane.b32.xlu0 %v1098, 4
    %v1122 = vpop.permute.xlu0 %1121
    %1123 = vrot.lane.b32.xlu0 %v1103, 4
    %v1124 = vpop.permute.xlu0 %1123
    %1125 = vrot.lane.b32.xlu0 %v1106, 4
    %v1126 = vpop.permute.xlu0 %1125
    %v1133 = vsel %vm409, %v1001, %v1116
    %v1134 = vsel %vm409, %v1004, %v1118
    %v1135 = vsel %vm409, %v1009, %v1120
    %v1136 = vsel %vm409, %v1012, %v1122
    %v1137 = vsel %vm409, %v1017, %v1124
    %v1138 = vsel %vm409, %v1020, %v1126
    %v1139 = vpack.c.bf16 %v1134, %v1133
    %v1140 = vpack.c.bf16 %v1136, %v1135
    %v1141 = vpack.c.bf16 %v1138, %v1137
    %v1142 = vld [vmem:[%s4 + $0x28] sm:$0xf]
    %v1143 = vld [vmem:[%s5 + $0x18] sm:$0x1]
    %v1144 = vlaneseq
    %v1145 = vshrl.u32 %v1144, 7
    %v1146 = vsub.s32 0, %v1145
    %v1147 = vrot.slane %v1143, %v1146
    %vm1148 = vcmask 56320
    %v1150 = vsel %vm1148, %v1139, 0
    %v1153 = vsel %vm1148, %v1140, 0
    %v1156 = vsel %vm1148, %v1141, 0
    %v1158 = vsel %vm1048, 4294967295, 65535
    %v1159 = vsel %vm459, %v1158, 0
    %v1161 = vand.u32 %v1142, %v1159
    %1163 = vmatprep.subr.bf16.mxu0 0
    %1164 = vmatpush1.bf16.msra.mxu0 0
    %1165 = vmatprep.subr.bf16.mxu0 0
    %1166 = vmatpush1.bf16.msra.mxu0 0
    %1167 = vmatprep.subr.bf16.mxu0 0
    %1168 = vmatpush1.bf16.msra.mxu0 0
    %1169 = vmatprep.subr.bf16.mxu0 0
    %1170 = vmatpush1.bf16.msra.mxu0 0
    %1171 = vmatprep.subr.bf16.mxu0 0
    %1172 = vmatpush1.bf16.msra.mxu0 0
    %1173 = vmatprep.subr.bf16.mxu0 0
    %1174 = vmatpush1.bf16.msra.mxu0 0
    %1175 = vmatprep.subr.bf16.mxu0 0
    %1176 = vmatpush1.bf16.msra.mxu0 0
    %1177 = vmatprep.subr.bf16.mxu0 0
    %1178 = vmatpush1.bf16.msra.mxu0 %v1161
    %1179 = vmatprep.subr.bf16.mxu0 0
    %1180 = vmatpush2.bf16.msra.mxu0 0
    %1181 = vmatprep.subr.bf16.mxu0 0
    %1182 = vmatpush2.bf16.msra.mxu0 0
    %1183 = vmatprep.subr.bf16.mxu0 0
    %1184 = vmatpush2.bf16.msra.mxu0 0
    %1185 = vmatprep.subr.bf16.mxu0 0
    %1186 = vmatpush2.bf16.msra.mxu0 0
    %1187 = vmatprep.subr.bf16.mxu0 0
    %1188 = vmatpush2.bf16.msra.mxu0 0
    %1189 = vmatprep.subr.bf16.mxu0 0
    %1190 = vmatpush2.bf16.msra.mxu0 0
    %1191 = vmatprep.subr.bf16.mxu0 0
    %1192 = vmatpush2.bf16.msra.mxu0 0
    %1193 = vmatprep.subr.bf16.mxu0 0
    %1194 = vmatpush2.bf16.msra.mxu0 0
    %1195 = vmatprep.mubr.bf16.mxu0 0
    %1196 = vmatmul.mubr.bf16.gmra.mxu0 %v1150
    %v1197 = vpop.f32.mrf.mxu0
    %v1198 = vadd.f32 %v1147, %v1197
    %v1199 = vpop.f32.mrf.mxu0
    %v1200 = vpop.f32.mrf.mxu0
    %v1201 = vadd.f32 %v1147, %v1200
    %v1202 = vpop.f32.mrf.mxu0
    %1203 = vmatprep.mubr.bf16.mxu0 0
    %1204 = vmatmul.mubr.bf16.gmra.mxu0 %v1153
    %v1205 = vpop.f32.mrf.mxu0
    %v1206 = vadd.f32 %v1147, %v1205
    %v1207 = vpop.f32.mrf.mxu0
    %v1208 = vpop.f32.mrf.mxu0
    %v1209 = vadd.f32 %v1147, %v1208
    %v1210 = vpop.f32.mrf.mxu0
    %1211 = vmatprep.mubr.bf16.mxu0 0
    %1212 = vmatmul.mubr.bf16.gmra.mxu0 %v1156
    %v1213 = vpop.f32.mrf.mxu0
    %v1214 = vadd.f32 %v1147, %v1213
    %v1215 = vpop.f32.mrf.mxu0
    %v1216 = vpop.f32.mrf.mxu0
    %v1217 = vadd.f32 %v1147, %v1216
    %v1218 = vpop.f32.mrf.mxu0
    %1219 = vdwg.mxu0
    %v1220 = vmax.f32 %v1198, 0.0
    %v1221 = vmax.f32 %v1201, 0.0
    %v1222 = vmax.f32 %v1206, 0.0
    %v1223 = vmax.f32 %v1209, 0.0
    %v1224 = vmax.f32 %v1214, 0.0
    %v1225 = vmax.f32 %v1217, 0.0
    %v1226 = vpack.c.bf16 %v1221, %v1220
    %v1227 = vpack.c.bf16 %v1223, %v1222
    %v1228 = vpack.c.bf16 %v1225, %v1224
    %v1229 = vld [vmem:[%s4 + $0x30] sm:$0xf]
    %v1230 = vld [vmem:[%s4 + $0x34] sm:$0xf]
    %v1231 = vld [vmem:[%s4 + $0x38] sm:$0xf]
    %v1232 = vld [vmem:[%s4 + $0x3c] sm:$0xf]
    %v1233 = vld [vmem:[%s5 + $0x20] sm:$0x1]
    %v1234 = vlaneseq
    %v1235 = vshrl.u32 %v1234, 7
    %v1236 = vsub.s32 0, %v1235
    %v1237 = vrot.slane %v1233, %v1236
    %v1242 = vunpack.c.l.b16 %v1229
    %v1243 = vunpack.c.l.b16 %v1230
    %v1244 = vunpack.c.l.b16 %v1231
    %v1245 = vunpack.c.l.b16 %v1232
    %v1246 = vpack.c.b16 %v1243, %v1242
    %v1247 = vpack.c.b16 %v1245, %v1244
    %v1251 = vsel %vm594, %v1226, 0
    %v1254 = vsel %vm594, %v1227, 0
    %v1257 = vsel %vm594, %v1228, 0
    %1259 = vmatprep.subr.bf16.mxu0 0
    %1260 = vmatpush1.bf16.msra.mxu0 0
    %1261 = vmatprep.subr.bf16.mxu0 0
    %1262 = vmatpush1.bf16.msra.mxu0 0
    %1263 = vmatprep.subr.bf16.mxu0 0
    %1264 = vmatpush1.bf16.msra.mxu0 0
    %1265 = vmatprep.subr.bf16.mxu0 0
    %1266 = vmatpush1.bf16.msra.mxu0 0
    %1267 = vmatprep.subr.bf16.mxu0 0
    %1268 = vmatpush1.bf16.msra.mxu0 0
    %1269 = vmatprep.subr.bf16.mxu0 0
    %1270 = vmatpush1.bf16.msra.mxu0 0
    %1271 = vmatprep.subr.bf16.mxu0 0
    %1272 = vmatpush1.bf16.msra.mxu0 %v1247
    %1273 = vmatprep.subr.bf16.mxu0 0
    %1274 = vmatpush1.bf16.msra.mxu0 %v1246
    %1275 = vmatprep.subr.bf16.mxu0 0
    %1276 = vmatpush2.bf16.msra.mxu0 0
    %1277 = vmatprep.subr.bf16.mxu0 0
    %1278 = vmatpush2.bf16.msra.mxu0 0
    %1279 = vmatprep.subr.bf16.mxu0 0
    %1280 = vmatpush2.bf16.msra.mxu0 0
    %1281 = vmatprep.subr.bf16.mxu0 0
    %1282 = vmatpush2.bf16.msra.mxu0 0
    %1283 = vmatprep.subr.bf16.mxu0 0
    %1284 = vmatpush2.bf16.msra.mxu0 0
    %1285 = vmatprep.subr.bf16.mxu0 0
    %1286 = vmatpush2.bf16.msra.mxu0 0
    %1287 = vmatprep.subr.bf16.mxu0 0
    %1288 = vmatpush2.bf16.msra.mxu0 0
    %1289 = vmatprep.subr.bf16.mxu0 0
    %1290 = vmatpush2.bf16.msra.mxu0 0
    %1291 = vmatprep.mubr.bf16.mxu0 0
    %1292 = vmatmul.mubr.bf16.gmra.mxu0 %v1251
    %v1293 = vpop.f32.mrf.mxu0
    %v1294 = vadd.f32 %v1237, %v1293
    %v1295 = vpop.f32.mrf.mxu0
    %v1296 = vpop.f32.mrf.mxu0
    %v1297 = vadd.f32 %v1237, %v1296
    %v1298 = vpop.f32.mrf.mxu0
    %1299 = vmatprep.mubr.bf16.mxu0 0
    %1300 = vmatmul.mubr.bf16.gmra.mxu0 %v1254
    %v1301 = vpop.f32.mrf.mxu0
    %v1302 = vadd.f32 %v1237, %v1301
    %v1303 = vpop.f32.mrf.mxu0
    %v1304 = vpop.f32.mrf.mxu0
    %v1305 = vadd.f32 %v1237, %v1304
    %v1306 = vpop.f32.mrf.mxu0
    %1307 = vmatprep.mubr.bf16.mxu0 0
    %1308 = vmatmul.mubr.bf16.gmra.mxu0 %v1257
    %v1309 = vpop.f32.mrf.mxu0
    %v1310 = vadd.f32 %v1237, %v1309
    %v1311 = vpop.f32.mrf.mxu0
    %v1312 = vpop.f32.mrf.mxu0
    %v1313 = vadd.f32 %v1237, %v1312
    %v1314 = vpop.f32.mrf.mxu0
    %1315 = vdwg.mxu0
    %v1316 = vmax.f32 %v1294, 0.0
    %v1317 = vmax.f32 %v1297, 0.0
    %v1318 = vmax.f32 %v1302, 0.0
    %v1319 = vmax.f32 %v1305, 0.0
    %v1320 = vmax.f32 %v1310, 0.0
    %v1321 = vmax.f32 %v1313, 0.0
    %v1322 = vpack.c.bf16 %v1317, %v1316
    %v1323 = vpack.c.bf16 %v1319, %v1318
    %v1324 = vpack.c.bf16 %v1321, %v1320
    %v1325 = vld [vmem:[%s4 + $0x40] sm:$0xf]
    %v1326 = vld [vmem:[%s4 + $0x44] sm:$0xf]
    %v1327 = vld [vmem:[%s4 + $0x48] sm:$0xf]
    %v1328 = vld [vmem:[%s4 + $0x4c] sm:$0xf]
    %v1329 = vld [vmem:[%s5 + $0x28] sm:$0x1]
    %v1330 = vlaneseq
    %v1331 = vshrl.u32 %v1330, 7
    %v1332 = vsub.s32 0, %v1331
    %v1333 = vrot.slane %v1329, %v1332
    %v1338 = vunpack.c.l.b16 %v1325
    %v1339 = vunpack.c.l.b16 %v1326
    %v1340 = vunpack.c.l.b16 %v1327
    %v1341 = vunpack.c.l.b16 %v1328
    %v1342 = vpack.c.b16 %v1339, %v1338
    %v1343 = vpack.c.b16 %v1341, %v1340
    %v1347 = vsel %vm594, %v1322, 0
    %v1350 = vsel %vm594, %v1323, 0
    %v1353 = vsel %vm594, %v1324, 0
    %1355 = vmatprep.subr.bf16.mxu0 0
    %1356 = vmatpush1.bf16.msra.mxu0 0
    %1357 = vmatprep.subr.bf16.mxu0 0
    %1358 = vmatpush1.bf16.msra.mxu0 0
    %1359 = vmatprep.subr.bf16.mxu0 0
    %1360 = vmatpush1.bf16.msra.mxu0 0
    %1361 = vmatprep.subr.bf16.mxu0 0
    %1362 = vmatpush1.bf16.msra.mxu0 0
    %1363 = vmatprep.subr.bf16.mxu0 0
    %1364 = vmatpush1.bf16.msra.mxu0 0
    %1365 = vmatprep.subr.bf16.mxu0 0
    %1366 = vmatpush1.bf16.msra.mxu0 0
    %1367 = vmatprep.subr.bf16.mxu0 0
    %1368 = vmatpush1.bf16.msra.mxu0 %v1343
    %1369 = vmatprep.subr.bf16.mxu0 0
    %1370 = vmatpush1.bf16.msra.mxu0 %v1342
    %1371 = vmatprep.subr.bf16.mxu0 0
    %1372 = vmatpush2.bf16.msra.mxu0 0
    %1373 = vmatprep.subr.bf16.mxu0 0
    %1374 = vmatpush2.bf16.msra.mxu0 0
    %1375 = vmatprep.subr.bf16.mxu0 0
    %1376 = vmatpush2.bf16.msra.mxu0 0
    %1377 = vmatprep.subr.bf16.mxu0 0
    %1378 = vmatpush2.bf16.msra.mxu0 0
    %1379 = vmatprep.subr.bf16.mxu0 0
    %1380 = vmatpush2.bf16.msra.mxu0 0
    %1381 = vmatprep.subr.bf16.mxu0 0
    %1382 = vmatpush2.bf16.msra.mxu0 0
    %1383 = vmatprep.subr.bf16.mxu0 0
    %1384 = vmatpush2.bf16.msra.mxu0 0
    %1385 = vmatprep.subr.bf16.mxu0 0
    %1386 = vmatpush2.bf16.msra.mxu0 0
    %1387 = vmatprep.mubr.bf16.mxu0 0
    %1388 = vmatmul.mubr.bf16.gmra.mxu0 %v1347
    %v1389 = vpop.f32.mrf.mxu0
    %v1390 = vadd.f32 %v1333, %v1389
    %v1391 = vpop.f32.mrf.mxu0
    %v1392 = vpop.f32.mrf.mxu0
    %v1393 = vadd.f32 %v1333, %v1392
    %v1394 = vpop.f32.mrf.mxu0
    %1395 = vmatprep.mubr.bf16.mxu0 0
    %1396 = vmatmul.mubr.bf16.gmra.mxu0 %v1350
    %v1397 = vpop.f32.mrf.mxu0
    %v1398 = vadd.f32 %v1333, %v1397
    %v1399 = vpop.f32.mrf.mxu0
    %v1400 = vpop.f32.mrf.mxu0
    %v1401 = vadd.f32 %v1333, %v1400
    %v1402 = vpop.f32.mrf.mxu0
    %1403 = vmatprep.mubr.bf16.mxu0 0
    %1404 = vmatmul.mubr.bf16.gmra.mxu0 %v1353
    %v1405 = vpop.f32.mrf.mxu0
    %v1406 = vadd.f32 %v1333, %v1405
    %v1407 = vpop.f32.mrf.mxu0
    %v1408 = vpop.f32.mrf.mxu0
    %v1409 = vadd.f32 %v1333, %v1408
    %v1410 = vpop.f32.mrf.mxu0
    %1411 = vdwg.mxu0
    %v1412 = vmax.f32 %v1390, 0.0
    %v1413 = vmax.f32 %v1393, 0.0
    %v1414 = vmax.f32 %v1398, 0.0
    %v1415 = vmax.f32 %v1401, 0.0
    %v1416 = vmax.f32 %v1406, 0.0
    %v1417 = vmax.f32 %v1409, 0.0
    %v1418 = vld [vmem:[%s3 + $0x4] sm:$0xf]
    %v1419 = vld [vmem:[%s3 + $0xc] sm:$0xf]
    %v1420 = vpack.c.bf16 %v1413, %v1412
    %v1421 = vpack.c.bf16 %v1415, %v1414
    %v1422 = vpack.c.bf16 %v1417, %v1416
    %v1425 = vunpack.c.l.b16 %v1418
    %v1426 = vunpack.c.l.b16 %v1419
    %v1427 = vpack.c.b16 %v1426, %v1425
    %vm1428 = vcmask 392192
    %v1430 = vsel %vm1428, %v1427, 0
    %1432 = vmatprep.subr.bf16.mxu0 0
    %1433 = vmatpush1.bf16.msra.mxu0 0
    %1434 = vmatprep.subr.bf16.mxu0 0
    %1435 = vmatpush1.bf16.msra.mxu0 0
    %1436 = vmatprep.subr.bf16.mxu0 0
    %1437 = vmatpush1.bf16.msra.mxu0 0
    %1438 = vmatprep.subr.bf16.mxu0 0
    %1439 = vmatpush1.bf16.msra.mxu0 0
    %1440 = vmatprep.subr.bf16.mxu0 0
    %1441 = vmatpush1.bf16.msra.mxu0 0
    %1442 = vmatprep.subr.bf16.mxu0 0
    %1443 = vmatpush1.bf16.msra.mxu0 %v1422
    %1444 = vmatprep.subr.bf16.mxu0 0
    %1445 = vmatpush1.bf16.msra.mxu0 %v1421
    %1446 = vmatprep.subr.bf16.mxu0 0
    %1447 = vmatpush1.bf16.msra.mxu0 %v1420
    %1448 = vmatprep.subr.bf16.mxu0 0
    %1449 = vmatpush2.bf16.msra.mxu0 0
    %1450 = vmatprep.subr.bf16.mxu0 0
    %1451 = vmatpush2.bf16.msra.mxu0 0
    %1452 = vmatprep.subr.bf16.mxu0 0
    %1453 = vmatpush2.bf16.msra.mxu0 0
    %1454 = vmatprep.subr.bf16.mxu0 0
    %1455 = vmatpush2.bf16.msra.mxu0 0
    %1456 = vmatprep.subr.bf16.mxu0 0
    %1457 = vmatpush2.bf16.msra.mxu0 0
    %1458 = vmatprep.subr.bf16.mxu0 0
    %1459 = vmatpush2.bf16.msra.mxu0 0
    %1460 = vmatprep.subr.bf16.mxu0 0
    %1461 = vmatpush2.bf16.msra.mxu0 0
    %1462 = vmatprep.subr.bf16.mxu0 0
    %1463 = vmatpush2.bf16.msra.mxu0 0
    %1464 = vmatprep.mubr.bf16.mxu0 0
    %1465 = vmatmul.mubr.bf16.gmra.mxu0 %v1430
    %v1466 = vpop.f32.mrf.mxu0
    %v1467 = vadd.f32 0.0, %v1466
    %v1468 = vpop.f32.mrf.mxu0
    %v1469 = vpop.f32.mrf.mxu0
    %v1470 = vadd.f32 0.0, %v1469
    %v1471 = vpop.f32.mrf.mxu0
    %1472 = vdwg.mxu0
    %v1473 = vpack.c.bf16 %v927, %v924
    %v1474 = vpack.c.bf16 %v1470, %v1467
    %1476 = vrot.lane.b32.xlu0 %v1473, 4
    %v1477 = vpop.permute.xlu0 %1476
    %1479 = vrot.lane.b32.xlu0 %v1474, 9
    %v1480 = vpop.permute.xlu0 %1479
    %v1483 = vsel %vm409, %v95, %v1477
    %vm1484 = vcmask 72704
    %v1486 = vsel %vm1484, %v1483, %v1480
    %v1487 = vld [vmem:[%s4 + $0x50] sm:$0xf]
    %v1488 = vld [vmem:[%s4 + $0x54] sm:$0x7]
    %v1489 = vld [vmem:[%s5 + $0x30] sm:$0x1]
    %v1490 = vlaneseq
    %v1491 = vshrl.u32 %v1490, 7
    %v1492 = vsub.s32 0, %v1491
    %v1493 = vrot.slane %v1489, %v1492
    %v1496 = vunpack.c.l.b16 %v1487
    %v1497 = vunpack.c.l.b16 %v1488
    %v1498 = vpack.c.b16 %v1497, %v1496
    %vm1499 = vcmask 113664
    %v1500 = vsel %vm1499, %v1486, 0
    %vm1502 = vcmask 1046528
    %v1504 = vsel %vm1502, %v1498, 0
    %1506 = vmatprep.subr.bf16.mxu0 0
    %1507 = vmatpush1.bf16.msra.mxu0 0
    %1508 = vmatprep.subr.bf16.mxu0 0
    %1509 = vmatpush1.bf16.msra.mxu0 0
    %1510 = vmatprep.subr.bf16.mxu0 0
    %1511 = vmatpush1.bf16.msra.mxu0 0
    %1512 = vmatprep.subr.bf16.mxu0 0
    %1513 = vmatpush1.bf16.msra.mxu0 0
    %1514 = vmatprep.subr.bf16.mxu0 0
    %1515 = vmatpush1.bf16.msra.mxu0 0
    %1516 = vmatprep.subr.bf16.mxu0 0
    %1517 = vmatpush1.bf16.msra.mxu0 0
    %1518 = vmatprep.subr.bf16.mxu0 0
    %1519 = vmatpush1.bf16.msra.mxu0 0
    %1520 = vmatprep.subr.bf16.mxu0 0
    %1521 = vmatpush1.bf16.msra.mxu0 %v1504
    %1522 = vmatprep.subr.bf16.mxu0 0
    %1523 = vmatpush2.bf16.msra.mxu0 0
    %1524 = vmatprep.subr.bf16.mxu0 0
    %1525 = vmatpush2.bf16.msra.mxu0 0
    %1526 = vmatprep.subr.bf16.mxu0 0
    %1527 = vmatpush2.bf16.msra.mxu0 0
    %1528 = vmatprep.subr.bf16.mxu0 0
    %1529 = vmatpush2.bf16.msra.mxu0 0
    %1530 = vmatprep.subr.bf16.mxu0 0
    %1531 = vmatpush2.bf16.msra.mxu0 0
    %1532 = vmatprep.subr.bf16.mxu0 0
    %1533 = vmatpush2.bf16.msra.mxu0 0
    %1534 = vmatprep.subr.bf16.mxu0 0
    %1535 = vmatpush2.bf16.msra.mxu0 0
    %1536 = vmatprep.subr.bf16.mxu0 0
    %1537 = vmatpush2.bf16.msra.mxu0 0
    %1538 = vmatprep.mubr.bf16.mxu0 0
    %1539 = vmatmul.mubr.bf16.gmra.mxu0 %v1500
    %v1540 = vpop.f32.mrf.mxu0
    %v1541 = vadd.f32 %v1493, %v1540
    %v1542 = vpop.f32.mrf.mxu0
    %v1543 = vpop.f32.mrf.mxu0
    %v1544 = vadd.f32 %v1493, %v1543
    %v1545 = vpop.f32.mrf.mxu0
    %1546 = vdwg.mxu0
    %v1547 = vmax.f32 %v1541, 0.0
    %v1548 = vmax.f32 %v1544, 0.0
    %v1549 = vpack.c.bf16 %v1548, %v1547
    %v1550 = vld [vmem:[%s4 + $0x58] sm:$0xf]
    %v1551 = vld [vmem:[%s4 + $0x5c] sm:$0xf]
    %v1552 = vld [vmem:[%s4 + $0x60] sm:$0xf]
    %v1553 = vld [vmem:[%s4 + $0x64] sm:$0xf]
    %v1554 = vld [vmem:[%s5 + $0x38] sm:$0x1]
    %v1555 = vlaneseq
    %v1556 = vshrl.u32 %v1555, 7
    %v1557 = vsub.s32 0, %v1556
    %v1558 = vrot.slane %v1554, %v1557
    %v1563 = vunpack.c.l.b16 %v1550
    %v1564 = vunpack.c.l.b16 %v1551
    %v1565 = vunpack.c.l.b16 %v1552
    %v1566 = vunpack.c.l.b16 %v1553
    %v1567 = vpack.c.b16 %v1564, %v1563
    %v1568 = vpack.c.b16 %v1566, %v1565
    %v1572 = vsel %vm594, %v1549, 0
    %1574 = vmatprep.subr.bf16.mxu0 0
    %1575 = vmatpush1.bf16.msra.mxu0 0
    %1576 = vmatprep.subr.bf16.mxu0 0
    %1577 = vmatpush1.bf16.msra.mxu0 0
    %1578 = vmatprep.subr.bf16.mxu0 0
    %1579 = vmatpush1.bf16.msra.mxu0 0
    %1580 = vmatprep.subr.bf16.mxu0 0
    %1581 = vmatpush1.bf16.msra.mxu0 0
    %1582 = vmatprep.subr.bf16.mxu0 0
    %1583 = vmatpush1.bf16.msra.mxu0 0
    %1584 = vmatprep.subr.bf16.mxu0 0
    %1585 = vmatpush1.bf16.msra.mxu0 0
    %1586 = vmatprep.subr.bf16.mxu0 0
    %1587 = vmatpush1.bf16.msra.mxu0 %v1568
    %1588 = vmatprep.subr.bf16.mxu0 0
    %1589 = vmatpush1.bf16.msra.mxu0 %v1567
    %1590 = vmatprep.subr.bf16.mxu0 0
    %1591 = vmatpush2.bf16.msra.mxu0 0
    %1592 = vmatprep.subr.bf16.mxu0 0
    %1593 = vmatpush2.bf16.msra.mxu0 0
    %1594 = vmatprep.subr.bf16.mxu0 0
    %1595 = vmatpush2.bf16.msra.mxu0 0
    %1596 = vmatprep.subr.bf16.mxu0 0
    %1597 = vmatpush2.bf16.msra.mxu0 0
    %1598 = vmatprep.subr.bf16.mxu0 0
    %1599 = vmatpush2.bf16.msra.mxu0 0
    %1600 = vmatprep.subr.bf16.mxu0 0
    %1601 = vmatpush2.bf16.msra.mxu0 0
    %1602 = vmatprep.subr.bf16.mxu0 0
    %1603 = vmatpush2.bf16.msra.mxu0 0
    %1604 = vmatprep.subr.bf16.mxu0 0
    %1605 = vmatpush2.bf16.msra.mxu0 0
    %1606 = vmatprep.mubr.bf16.mxu0 0
    %1607 = vmatmul.mubr.bf16.gmra.mxu0 %v1572
    %v1608 = vpop.f32.mrf.mxu0
    %v1609 = vadd.f32 %v1558, %v1608
    %v1610 = vpop.f32.mrf.mxu0
    %v1611 = vpop.f32.mrf.mxu0
    %v1612 = vadd.f32 %v1558, %v1611
    %v1613 = vpop.f32.mrf.mxu0
    %1614 = vdwg.mxu0
    %v1615 = vmax.f32 %v1609, 0.0
    %v1616 = vmax.f32 %v1612, 0.0
    %v1617 = vpack.c.bf16 %v1616, %v1615
    %v1618 = vld [vmem:[%s4 + $0x68] sm:$0xf]
    %v1619 = vld [vmem:[%s4 + $0x6c] sm:$0xf]
    %v1620 = vld [vmem:[%s4 + $0x70] sm:$0xf]
    %v1621 = vld [vmem:[%s4 + $0x74] sm:$0xf]
    %v1622 = vld [vmem:[%s5 + $0x40] sm:$0x1]
    %v1623 = vlaneseq
    %v1624 = vshrl.u32 %v1623, 7
    %v1625 = vsub.s32 0, %v1624
    %v1626 = vrot.slane %v1622, %v1625
    %v1631 = vunpack.c.l.b16 %v1618
    %v1632 = vunpack.c.l.b16 %v1619
    %v1633 = vunpack.c.l.b16 %v1620
    %v1634 = vunpack.c.l.b16 %v1621
    %v1635 = vpack.c.b16 %v1632, %v1631
    %v1636 = vpack.c.b16 %v1634, %v1633
    %v1640 = vsel %vm594, %v1617, 0
    %1642 = vmatprep.subr.bf16.mxu0 0
    %1643 = vmatpush1.bf16.msra.mxu0 0
    %1644 = vmatprep.subr.bf16.mxu0 0
    %1645 = vmatpush1.bf16.msra.mxu0 0
    %1646 = vmatprep.subr.bf16.mxu0 0
    %1647 = vmatpush1.bf16.msra.mxu0 0
    %1648 = vmatprep.subr.bf16.mxu0 0
    %1649 = vmatpush1.bf16.msra.mxu0 0
    %1650 = vmatprep.subr.bf16.mxu0 0
    %1651 = vmatpush1.bf16.msra.mxu0 0
    %1652 = vmatprep.subr.bf16.mxu0 0
    %1653 = vmatpush1.bf16.msra.mxu0 0
    %1654 = vmatprep.subr.bf16.mxu0 0
    %1655 = vmatpush1.bf16.msra.mxu0 %v1636
    %1656 = vmatprep.subr.bf16.mxu0 0
    %1657 = vmatpush1.bf16.msra.mxu0 %v1635
    %1658 = vmatprep.subr.bf16.mxu0 0
    %1659 = vmatpush2.bf16.msra.mxu0 0
    %1660 = vmatprep.subr.bf16.mxu0 0
    %1661 = vmatpush2.bf16.msra.mxu0 0
    %1662 = vmatprep.subr.bf16.mxu0 0
    %1663 = vmatpush2.bf16.msra.mxu0 0
    %1664 = vmatprep.subr.bf16.mxu0 0
    %1665 = vmatpush2.bf16.msra.mxu0 0
    %1666 = vmatprep.subr.bf16.mxu0 0
    %1667 = vmatpush2.bf16.msra.mxu0 0
    %1668 = vmatprep.subr.bf16.mxu0 0
    %1669 = vmatpush2.bf16.msra.mxu0 0
    %1670 = vmatprep.subr.bf16.mxu0 0
    %1671 = vmatpush2.bf16.msra.mxu0 0
    %1672 = vmatprep.subr.bf16.mxu0 0
    %1673 = vmatpush2.bf16.msra.mxu0 0
    %1674 = vmatprep.mubr.bf16.mxu0 0
    %1675 = vmatmul.mubr.bf16.gmra.mxu0 %v1640
    %v1676 = vpop.f32.mrf.mxu0
    %v1677 = vadd.f32 %v1626, %v1676
    %v1678 = vpop.f32.mrf.mxu0
    %v1679 = vpop.f32.mrf.mxu0
    %v1680 = vadd.f32 %v1626, %v1679
    %v1681 = vpop.f32.mrf.mxu0
    %1682 = vdwg.mxu0
    %v1683 = vmax.f32 %v1677, 0.0
    %v1684 = vmax.f32 %v1680, 0.0
    %v1685 = vlaneseq
    %v1686 = vshrl.u32 %v1685, 7
    %v1687 = vlaneseq
    %v1688 = vand.u32 %v1687, 127
    %v1689 = vmul.u32 %v1686, 8
    %vm1690 = vcmp.ge.s32.totalorder %v1688, %v1689
    %v1691 = vadd.s32 %v1689, 8
    %vm1692 = vcmp.lt.s32.totalorder %v1688, %v1691
    %vm1693 = vmand %vm1690, %vm1692
    %v1694 = vsel %vm1693, 1.0, 0.0
    %v1695 = vpack.c.bf16 %v1694, %v1694
    %v1696 = vpack.c.bf16 %v1684, %v1683
    %v1698 = vsel %vm97, %v1695, 0
    %1700 = vmatprep.subr.bf16.mxu0 0
    %1701 = vmatpush1.bf16.msra.mxu0 0
    %1702 = vmatprep.subr.bf16.mxu0 0
    %1703 = vmatpush1.bf16.msra.mxu0 0
    %1704 = vmatprep.subr.bf16.mxu0 0
    %1705 = vmatpush1.bf16.msra.mxu0 0
    %1706 = vmatprep.subr.bf16.mxu0 0
    %1707 = vmatpush1.bf16.msra.mxu0 0
    %1708 = vmatprep.subr.bf16.mxu0 0
    %1709 = vmatpush1.bf16.msra.mxu0 0
    %1710 = vmatprep.subr.bf16.mxu0 0
    %1711 = vmatpush1.bf16.msra.mxu0 0
    %1712 = vmatprep.subr.bf16.mxu0 0
    %1713 = vmatpush1.bf16.msra.mxu0 0
    %1714 = vmatprep.subr.bf16.mxu0 0
    %1715 = vmatpush1.bf16.msra.mxu0 %v1696
    %1716 = vmatprep.subr.bf16.mxu0 0
    %1717 = vmatpush2.bf16.msra.mxu0 0
    %1718 = vmatprep.subr.bf16.mxu0 0
    %1719 = vmatpush2.bf16.msra.mxu0 0
    %1720 = vmatprep.subr.bf16.mxu0 0
    %1721 = vmatpush2.bf16.msra.mxu0 0
    %1722 = vmatprep.subr.bf16.mxu0 0
    %1723 = vmatpush2.bf16.msra.mxu0 0
    %1724 = vmatprep.subr.bf16.mxu0 0
    %1725 = vmatpush2.bf16.msra.mxu0 0
    %1726 = vmatprep.subr.bf16.mxu0 0
    %1727 = vmatpush2.bf16.msra.mxu0 0
    %1728 = vmatprep.subr.bf16.mxu0 0
    %1729 = vmatpush2.bf16.msra.mxu0 0
    %1730 = vmatprep.subr.bf16.mxu0 0
    %1731 = vmatpush2.bf16.msra.mxu0 0
    %1732 = vmatprep.mubr.bf16.mxu0 0
    %1733 = vmatmul.mubr.bf16.gmra.mxu0 %v1698
    %v1734 = vpop.f32.mrf.mxu0
    %v1735 = vadd.f32 0.0, %v1734
    %v1736 = vpop.f32.mrf.mxu0
    %v1737 = vpop.f32.mrf.mxu0
    %v1738 = vpop.f32.mrf.mxu0
    %1739 = vdwg.mxu0
    %v1740 = vpack.c.bf16 %v1735, %v1735
    %v1741 = vld [vmem:[%s4 + $0x78] sm:$0x7]
    %v1742 = vld [vmem:[%s5 + $0x48] sm:$0x1]
    %v1743 = vlaneseq
    %v1744 = vshrl.u32 %v1743, 7
    %v1745 = vsub.s32 0, %v1744
    %v1746 = vrot.slane %v1742, %v1745
    %v1748 = vsel %vm1038, %v1740, 0
    %v1751 = vsel %vm1048, %v1741, 0
    %1753 = vmatprep.subr.bf16.mxu0 0
    %1754 = vmatpush1.bf16.msra.mxu0 0
    %1755 = vmatprep.subr.bf16.mxu0 0
    %1756 = vmatpush1.bf16.msra.mxu0 0
    %1757 = vmatprep.subr.bf16.mxu0 0
    %1758 = vmatpush1.bf16.msra.mxu0 0
    %1759 = vmatprep.subr.bf16.mxu0 0
    %1760 = vmatpush1.bf16.msra.mxu0 0
    %1761 = vmatprep.subr.bf16.mxu0 0
    %1762 = vmatpush1.bf16.msra.mxu0 0
    %1763 = vmatprep.subr.bf16.mxu0 0
    %1764 = vmatpush1.bf16.msra.mxu0 0
    %1765 = vmatprep.subr.bf16.mxu0 0
    %1766 = vmatpush1.bf16.msra.mxu0 0
    %1767 = vmatprep.subr.bf16.mxu0 0
    %1768 = vmatpush1.bf16.msra.mxu0 %v1751
    %1769 = vmatprep.subr.bf16.mxu0 0
    %1770 = vmatpush2.bf16.msra.mxu0 0
    %1771 = vmatprep.subr.bf16.mxu0 0
    %1772 = vmatpush2.bf16.msra.mxu0 0
    %1773 = vmatprep.subr.bf16.mxu0 0
    %1774 = vmatpush2.bf16.msra.mxu0 0
    %1775 = vmatprep.subr.bf16.mxu0 0
    %1776 = vmatpush2.bf16.msra.mxu0 0
    %1777 = vmatprep.subr.bf16.mxu0 0
    %1778 = vmatpush2.bf16.msra.mxu0 0
    %1779 = vmatprep.subr.bf16.mxu0 0
    %1780 = vmatpush2.bf16.msra.mxu0 0
    %1781 = vmatprep.subr.bf16.mxu0 0
    %1782 = vmatpush2.bf16.msra.mxu0 0
    %1783 = vmatprep.subr.bf16.mxu0 0
    %1784 = vmatpush2.bf16.msra.mxu0 0
    %1785 = vmatprep.mubr.bf16.mxu0 0
    %1786 = vmatmul.mubr.bf16.gmra.mxu0 %v1748
    %v1787 = vpop.f32.mrf.mxu0
    %v1788 = vadd.f32 %v1746, %v1787
    %v1789 = vpop.f32.mrf.mxu0
    %v1790 = vpop.f32.mrf.mxu0
    %v1791 = vpop.f32.mrf.mxu0
    %1792 = vdwg.mxu0
    %1794 = vrot.lane.b32.xlu0 %v1735, 2
    %v1795 = vpop.permute.xlu0 %1794
    %vm1797 = vcmask 15360
    %v1798 = vsel %vm1797, %v1788, %v1795
    %vm1799 = vcmask 58368
    %1800 = vst.msk [vmem:[#allocation2] sm:$0x3] %vm1799, %v1798
    // Predicated region
    $region26: #{tpu_custom_call.1} parent=1 // pred_check
      _
    $region27: #{tpu_custom_call.1} parent=1 // pred_check_branch
      %1802 = sbr.rel (0) target = $region29
    $region28: #{tpu_custom_call.1} parent=1 // pred_region
      %s1804 = ssub.s32 32, 32
      %1805 = vsyncadd [#allocation3], %s1804
      %s1807 = sshll.u32 [#allocation2], 4
      %s1808 = int_to_ptr.vmem [resolvable:$true] %s1807
      %1810 = dma.vmem_to_hbm [thread:$0]  %s1808, 32, %s6, [#allocation3]
    $region29: #{tpu_custom_call.1} parent=1 // pred_fallthru
      _
    // Predicated region
    $region30: #{tpu_custom_call.1} parent=1 // pred_check
      _
    $region31: #{tpu_custom_call.1} parent=1 // pred_check_branch
      %1812 = sbr.rel (0) target = $region33
    $region32: #{tpu_custom_call.1} parent=1 // pred_region
      %1813 = dma.done [#allocation3], 32
    $region33: #{tpu_custom_call.1} parent=1 // pred_fallthru
      _
    %1814 = vsyncpa [#allocation3], 1

</llo_original>
